<compile_context>
chip_gen: v5e
topology: v5e:2x2
jax: 0.10.0
libtpu: 0.0.40
codegen_flags: <defaults>
</compile_context>

<pallas_src>
import math

import jax
import jax.numpy as jnp
from jax import lax
from jax.experimental import pallas as pl
from jax.experimental.pallas import tpu as pltpu


# ----------------------------------------------------------------------------
# Host-side construction of the (static, cached) resize matrices
# ----------------------------------------------------------------------------
def _bilinear_matrix(in_size: int, out_size: int, scale_factor=None):
    """Row-stochastic (out_size, in_size) f32 matrix reproducing
    F.interpolate(mode='bilinear', align_corners=False) along one axis.
    Coordinate scale is 1/scale_factor (PyTorch recompute_scale_factor=None path)."""
    scale = (1.0 / float(scale_factor)) if scale_factor is not None \
        else float(in_size) / float(out_size)
    dst = jnp.arange(out_size, dtype=jnp.float32)
    src = jnp.clip((dst + 0.5) * scale - 0.5, 0.0, float(in_size - 1))
    i0 = jnp.floor(src).astype(jnp.int32)
    i1 = jnp.minimum(i0 + 1, in_size - 1)
    lam = src - i0.astype(jnp.float32)
    return (jax.nn.one_hot(i0, in_size, dtype=jnp.float32) * (1.0 - lam)[:, None]
            + jax.nn.one_hot(i1, in_size, dtype=jnp.float32) * lam[:, None])


def _composed_resize_matrix(size: int, n_stages: int, multiplier: float):
    """Compose n_stages of per-stage bilinear matrices (each stage uses the floor'ed
    intermediate size, exactly like the PyTorch loop) into one (out, size) f32 matrix."""
    a = jnp.eye(size, dtype=jnp.float32)
    cur = size
    for _ in range(n_stages):
        nxt = int(math.floor(cur * multiplier))
        if nxt < 1:
            raise ValueError(
                f"Rescaled size reached {nxt} (< 1) starting from {size} with "
                f"multiplier={multiplier} over {n_stages} stages.")
        a = _bilinear_matrix(cur, nxt, multiplier) @ a
        cur = nxt
    return a, cur


# ----------------------------------------------------------------------------
# VMEM budgeting helpers
# ----------------------------------------------------------------------------
_VMEM_CAP_CACHE = []


def _vmem_capacity_bytes():
    if not _VMEM_CAP_CACHE:
        try:
            _VMEM_CAP_CACHE.append(int(pltpu.get_tpu_info().vmem_capacity_bytes))
        except Exception:
            _VMEM_CAP_CACHE.append(64 * 1024 * 1024)  # v7x-safe default
    return _VMEM_CAP_CACHE[0]


def _choose_wo_tile(N, C, Hi, Wi, Ho, Kc, Wo, x_bytes, op_bytes, out_bytes):
    """Largest 256-aligned width tile that keeps the per-step footprint inside a VMEM
    budget (v7x: 64 MiB physical; v5e: 16 MiB default scoped limit).  Small outputs keep
    the full Wo so the last block dim equals the array dim (no padded MXU columns)."""
    if Wo <= 512:
        wo_tile = Wo
    else:
        budget = min(40 * 1024 * 1024, (_vmem_capacity_bytes() * 6) // 10)
        fixed = 2 * C * Hi * Wi * x_bytes + C * Ho * Hi * op_bytes
        per_col = (2 * Wi * op_bytes                    # awt tile (double-buffered)
                   + 2 * Kc * Ho * out_bytes            # output tile (double-buffered)
                   + 4 * (C * Hi + C * Ho + Kc * Ho))   # f32 intermediates
        cols = max((budget - fixed) // per_col, 256)
        wo_tile = Wo if cols >= Wo else max(256, (int(cols) // 256) * 256)
    # v7x megacore: a single-image call should still expose >= 2 "parallel" grid steps.
    if N == 1 and wo_tile >= Wo and Wo >= 512:
        wo_tile = max(256, ((Wo // 2) // 256) * 256)
    return wo_tile


# ----------------------------------------------------------------------------
# Pallas kernel (hot path)
# ----------------------------------------------------------------------------
def _make_kernel(C: int, Hi: int, remap: bool, K: int):
    """Fused kernel: width resize (one big MXU matmul, M = C*Hi), channel-batched height
    resize (no kron / structural zeros), optional 1x1 channel map (VPU FMAs from SMEM)."""

    def _resize(x_ref, awt_ref, ahb_ref):
        # x_ref: (1, C*Hi, Wi); awt_ref: (Wi, tw); ahb_ref: (C, Ho, Hi)
        t = jnp.dot(x_ref[0], awt_ref[...],
                    preferred_element_type=jnp.float32)          # (C*Hi, tw), f32 acc
        tw = t.shape[-1]
        # Free relayout when Hi % 8 == 0 (sublane-aligned split of the M dim).
        t3 = t.reshape(C, Hi, tw).astype(ahb_ref.dtype)
        # out[c, o, v] = sum_h ah[o, h] * t3[c, h, v]   (batched over channels)
        return lax.dot_general(
            ahb_ref[...], t3,
            dimension_numbers=(((2,), (1,)), ((0,), (0,))),
            preferred_element_type=jnp.float32)                  # (C, Ho, tw), f32

    if not remap:
        def kernel(x_ref, awt_ref, ahb_ref, o_ref):
            o_ref[0] = _resize(x_ref, awt_ref, ahb_ref).astype(o_ref.dtype)
        return kernel

    def kernel(x_ref, awt_ref, ahb_ref, w_ref, o_ref):
        h = _resize(x_ref, awt_ref, ahb_ref)                     # (C, Ho, tw), f32
        # 1x1 conv, bias=False: out[k] = sum_c w[k, c] * h[c].  K*C*Ho*tw MACs is the
        # minimum possible work; done as scalar-broadcast VPU FMAs (weights in SMEM).
        # TODO(synk): for K, C >= ~128 emit this as an MXU matmul pass instead.
        for k in range(K):
            acc = w_ref[k, 0] * h[0]
            for c in range(1, C):
                acc = acc + w_ref[k, c] * h[c]
            o_ref[0, k] = acc.astype(o_ref.dtype)
    return kernel


def spatial_rescale_pallas(x, awt, ahb, w=None):
    """out[n, k] = sum_c w[k, c] * (A_h @ x[n, c] @ A_w^T), fused in ONE pallas_call.

    x:   (N, C, Hi, Wi)
    awt: (Wi, Wo)     composed width-resize matrix, pre-transposed
    ahb: (C, Ho, Hi)  composed height-resize matrix broadcast over channels
    w:   (K, C) f32 1x1-conv weight (bias=False) or None (identity channel map)
    Returns (N, K or C, Ho, Wo) in x.dtype.
    """
    N, C, Hi, Wi = x.shape
    Wo = int(awt.shape[1])
    Cb, Ho, Hib = ahb.shape
    assert Cb == C and Hib == Hi and awt.shape[0] == Wi
    remap = w is not None
    Kc = int(w.shape[0]) if remap else C

    x_bytes = x.dtype.itemsize
    op_bytes = awt.dtype.itemsize
    out_bytes = x.dtype.itemsize

    wo_tile = _choose_wo_tile(N, C, Hi, Wi, Ho, Kc, Wo, x_bytes, op_bytes, out_bytes)
    nw = pl.cdiv(Wo, wo_tile)   # partial last tile: Pallas masks the writeback; columns
                                # computed from padded awt lanes are discarded (correct).

    xf = x.reshape(N, C * Hi, Wi)        # free row-major reshape (outside the kernel)
    args = [xf, awt, ahb]
    if remap:
        args.append(w.astype(jnp.float32))

    # Per-step VMEM requirement (double buffers + f32 intermediates) -> scoped limit.
    vmem_need = ((1 if N == 1 else 2) * C * Hi * Wi * x_bytes
                 + (1 if nw == 1 else 2) * Wi * wo_tile * op_bytes
                 + C * Ho * Hi * op_bytes
                 + 2 * Kc * Ho * wo_tile * out_bytes
                 + 4 * (C * Hi + C * Ho + Kc * Ho) * wo_tile)
    vmem_limit = int(min(max(2 * vmem_need, 32 * 1024 * 1024),
                         (_vmem_capacity_bytes() * 9) // 10))

    flops = 2 * N * Wo * (C * Hi * Wi + C * Ho * Hi + (Kc * C * Ho if remap else 0))
    bytes_accessed = (xf.size * x_bytes + awt.size * op_bytes + ahb.size * op_bytes
                      + (w.size * 4 if remap else 0) + N * Kc * Ho * Wo * out_bytes)

    kernel = _make_kernel(C, Hi, remap, Kc)
    out_shape = jax.ShapeDtypeStruct((N, Kc, Ho, Wo), x.dtype)

    def _run(single_buffer_constants: bool):
        def spec(shape, index_map, grid_invariant=False):
            if grid_invariant and single_buffer_constants:
                # Grid-invariant operand: a second pipeline buffer is pure VMEM waste.
                return pl.BlockSpec(shape, index_map, pipeline_mode=pl.Buffered(1))
            return pl.BlockSpec(shape, index_map)

        in_specs = [
            spec((1, C * Hi, Wi), lambda n, j: (n, 0, 0), grid_invariant=(N == 1)),
            spec((Wi, wo_tile), lambda n, j: (0, j), grid_invariant=(nw == 1)),
            spec((C, Ho, Hi), lambda n, j: (0, 0, 0), grid_invariant=True),
        ]
        if remap:
            in_specs.append(pl.BlockSpec(memory_space=pltpu.MemorySpace.SMEM))

        return pl.pallas_call(
            kernel,
            out_shape=out_shape,
            grid=(N, nw),
            in_specs=in_specs,
            out_specs=pl.BlockSpec((1, Kc, Ho, wo_tile), lambda n, j: (n, 0, 0, j)),
            compiler_params=pltpu.CompilerParams(
                dimension_semantics=("parallel", "parallel"),
                vmem_limit_bytes=vmem_limit),
            cost_estimate=pl.CostEstimate(
                flops=int(flops), transcendentals=0,
                bytes_accessed=int(bytes_accessed)),
        )(*args)

    try:
        return _run(True)
    except Exception:
        # Fallback for JAX builds without pipeline_mode=pl.Buffered(1) support.
        return _run(False)


# ----------------------------------------------------------------------------
# Module equivalent
# ----------------------------------------------------------------------------
class SpatialRescalerPallas:
    def __init__(self, n_stages=1, method='bilinear', multiplier=0.5,
                 in_channels=3, out_channels=None, bias=False, key=None,
                 force_f32_matmul=False):
        assert n_stages >= 0
        # TODO(synk): only 'bilinear' is implemented; nearest/linear/trilinear/bicubic/area
        # interpolate modes of the reference module are not translated.
        assert method == 'bilinear'
        # TODO(synk): Conv2d bias=True channel mapper not implemented (reference default
        # is bias=False).
        assert not bias
        self.n_stages = n_stages
        self.multiplier = multiplier
        self.in_channels = in_channels
        self.remap_output = out_channels is not None
        self.force_f32_matmul = force_f32_matmul
        if self.remap_output:
            if key is None:
                key = jax.random.PRNGKey(0)
            # nn.Conv2d(in, out, 1, bias=False).weight, kaiming-uniform-like bound.
            bound = 1.0 / math.sqrt(in_channels)
            self.w = jax.random.uniform(key, (out_channels, in_channels),
                                        dtype=jnp.float32, minval=-bound, maxval=bound)
        else:
            self.w = None
        self._mat_cache = {}  # (Hi, Wi, op_dtype) -> (awt, ahb)

    def _matrices(self, Hi, Wi, op_dtype):
        ck = (Hi, Wi, jnp.dtype(op_dtype).name)
        if ck not in self._mat_cache:
            ah, Ho = _composed_resize_matrix(Hi, self.n_stages, self.multiplier)
            aw, Wo = _composed_resize_matrix(Wi, self.n_stages, self.multiplier)
            awt = aw.T.astype(op_dtype)                                        # (Wi, Wo)
            ahb = jnp.broadcast_to(ah, (self.in_channels, Ho, Hi)).astype(op_dtype)
            self._mat_cache[ck] = (awt, ahb)
        return self._mat_cache[ck]

    def __call__(self, x):
        N, C, Hi, Wi = x.shape
        assert C == self.in_channels
        # bf16/f16 inputs use same-dtype resize matrices -> fast MXU rate (f32 accumulate).
        if (not self.force_f32_matmul) and x.dtype in (jnp.bfloat16, jnp.float16):
            op_dtype = x.dtype
        else:
            op_dtype = jnp.float32
        awt, ahb = self._matrices(Hi, Wi, op_dtype)
        return spatial_rescale_pallas(x, awt, ahb, self.w)   # (N, K or C, Ho, Wo)

    def encode(self, x):
        return self(x)


# ----------------------------------------------------------------------------
# Demo / correctness check
# ----------------------------------------------------------------------------
if __name__ == "__main__":
    key = jax.random.PRNGKey(0)
    kx, kw = jax.random.split(key)

    N, C, H, W = 2, 3, 16, 16
    COUT = 8
    x = jax.random.normal(kx, (N, C, H, W), dtype=jnp.float32)

    # Case 1: one stage, remap 3 -> 8 channels (fused 1x1 conv).
    m1 = SpatialRescalerPallas(n_stages=1, method='bilinear', multiplier=0.5,
                               in_channels=C, out_channels=COUT, bias=False, key=kw)
    y1 = jax.block_until_ready(m1(x))
    assert y1.shape == (N, COUT, H // 2, W // 2), y1.shape
    # scale_factor=0.5, align_corners=False bilinear downsampling == 2x2 average pool;
    # then the 1x1 conv is a channel matmul.
    pooled = x.reshape(N, C, H // 2, 2, W // 2, 2).mean(axis=(3, 5))
    ref1 = jnp.einsum('kc,nchw->nkhw', m1.w, pooled)
    assert jnp.allclose(y1, ref1, atol=1e-5, rtol=1e-5), \
        float(jnp.max(jnp.abs(y1 - ref1)))

    # Case 2: two stages (composed into ONE kernel pass), no channel remap.
    m2 = SpatialRescalerPallas(n_stages=2, method='bilinear', multiplier=0.5,
                               in_channels=C)
    y2 = jax.block_until_ready(m2(x))
    assert y2.shape == (N, C, H // 4, W // 4), y2.shape
    ref2 = x.reshape(N, C, H // 4, 4, W // 4, 4).mean(axis=(3, 5))   # 4x4 avg pool
    assert jnp.allclose(y2, ref2, atol=1e-5, rtol=1e-5), \
        float(jnp.max(jnp.abs(y2 - ref2)))

    # Case 3: bf16 fast-path smoke test (bf16 operands, f32 accumulation).
    xb = x.astype(jnp.bfloat16)
    y3 = jax.block_until_ready(m2(xb))
    assert y3.shape == (N, C, H // 4, W // 4) and y3.dtype == jnp.bfloat16
    ref3 = xb.astype(jnp.float32).reshape(N, C, H // 4, 4, W // 4, 4).mean(axis=(3, 5))
    assert jnp.allclose(y3.astype(jnp.float32), ref3, atol=1e-1, rtol=1e-1), \
        float(jnp.max(jnp.abs(y3.astype(jnp.float32) - ref3)))

    print("KERNEL_OK")
</pallas_src>

<mosaic_0001>
module attributes {stable_mosaic.version = 11 : i64} {
  func.func @kernel(%arg0: i32, %arg1: i32, %arg2: memref<1x48x16xf32, #tpu.memory_space<vmem>>, %arg3: memref<16x8xf32, #tpu.memory_space<vmem>>, %arg4: memref<3x8x16xf32, #tpu.memory_space<vmem>>, %arg5: memref<8x3xf32, #tpu.memory_space<smem>>, %arg6: memref<1x8x8x8xf32, #tpu.memory_space<vmem>>) attributes {dimension_semantics = [#tpu.dimension_semantics<parallel>, #tpu.dimension_semantics<parallel>], iteration_bounds = array<i64: 2, 1>, scalar_prefetch = 0 : i64, scratch_operands = 0 : i64, tpu.core_type = #tpu.core_type<tc>, window_params = [{transform_indices = @transform_0, window_bounds = array<i64: 1, 48, 16>}, {pipeline_mode = #tpu.pipeline_mode<synchronous>, transform_indices = @transform_1, window_bounds = array<i64: 16, 8>}, {pipeline_mode = #tpu.pipeline_mode<synchronous>, transform_indices = @transform_2, window_bounds = array<i64: 3, 8, 16>}, {transform_indices = @transform_3, window_bounds = array<i64: 8, 3>}, {transform_indices = @transform_4, window_bounds = array<i64: 1, 8, 8, 8>}]} {
    %c0 = arith.constant 0 : index
    %c0_0 = arith.constant 0 : index
    %c0_1 = arith.constant 0 : index
    %0 = vector.load %arg2[%c0, %c0_0, %c0_1] : memref<1x48x16xf32, #tpu.memory_space<vmem>>, vector<1x48x16xf32>
    %1 = vector.shape_cast %0 : vector<1x48x16xf32> to vector<48x16xf32>
    %c0_2 = arith.constant 0 : index
    %c0_3 = arith.constant 0 : index
    %2 = vector.load %arg3[%c0_2, %c0_3] : memref<16x8xf32, #tpu.memory_space<vmem>>, vector<16x8xf32>
    %cst = arith.constant dense<0.000000e+00> : vector<48x8xf32>
    %3 = tpu.matmul %1, %2, %cst {dimension_numbers = #tpu.dot_dimension_numbers<[1], [0], [0], [1], [0, 0, 1, 1], [], []>} : vector<48x16xf32>, vector<16x8xf32>, vector<48x8xf32> -> vector<48x8xf32>
    %4 = vector.shape_cast %3 : vector<48x8xf32> to vector<3x16x8xf32>
    %c0_4 = arith.constant 0 : index
    %c0_5 = arith.constant 0 : index
    %c0_6 = arith.constant 0 : index
    %5 = vector.load %arg4[%c0_4, %c0_5, %c0_6] : memref<3x8x16xf32, #tpu.memory_space<vmem>>, vector<3x8x16xf32>
    %cst_7 = arith.constant dense<0.000000e+00> : vector<3x8x8xf32>
    %6 = tpu.matmul %5, %4, %cst_7 {dimension_numbers = #tpu.dot_dimension_numbers<[2], [1], [1], [2], [0, 0, 0, 1, 1, 2], [0], [0]>} : vector<3x8x16xf32>, vector<3x16x8xf32>, vector<3x8x8xf32> -> vector<3x8x8xf32>
    %c0_8 = arith.constant 0 : index
    %c0_9 = arith.constant 0 : index
    %7 = memref.load %arg5[%c0_8, %c0_9] : memref<8x3xf32, #tpu.memory_space<smem>>
    %8 = vector.extract_strided_slice %6 {offsets = [0, 0, 0], sizes = [1, 8, 8], strides = [1, 1, 1]} : vector<3x8x8xf32> to vector<1x8x8xf32>
    %9 = vector.shape_cast %8 : vector<1x8x8xf32> to vector<8x8xf32>
    %10 = vector.broadcast %7 : f32 to vector<8x8xf32>
    %11 = arith.mulf %10, %9 : vector<8x8xf32>
    %c0_10 = arith.constant 0 : index
    %c1 = arith.constant 1 : index
    %12 = memref.load %arg5[%c0_10, %c1] : memref<8x3xf32, #tpu.memory_space<smem>>
    %13 = vector.extract_strided_slice %6 {offsets = [1, 0, 0], sizes = [1, 8, 8], strides = [1, 1, 1]} : vector<3x8x8xf32> to vector<1x8x8xf32>
    %14 = vector.shape_cast %13 : vector<1x8x8xf32> to vector<8x8xf32>
    %15 = vector.broadcast %12 : f32 to vector<8x8xf32>
    %16 = arith.mulf %15, %14 : vector<8x8xf32>
    %17 = arith.addf %11, %16 : vector<8x8xf32>
    %c0_11 = arith.constant 0 : index
    %c2 = arith.constant 2 : index
    %18 = memref.load %arg5[%c0_11, %c2] : memref<8x3xf32, #tpu.memory_space<smem>>
    %19 = vector.extract_strided_slice %6 {offsets = [2, 0, 0], sizes = [1, 8, 8], strides = [1, 1, 1]} : vector<3x8x8xf32> to vector<1x8x8xf32>
    %20 = vector.shape_cast %19 : vector<1x8x8xf32> to vector<8x8xf32>
    %21 = vector.broadcast %18 : f32 to vector<8x8xf32>
    %22 = arith.mulf %21, %20 : vector<8x8xf32>
    %23 = arith.addf %17, %22 : vector<8x8xf32>
    %c0_12 = arith.constant 0 : index
    %c0_13 = arith.constant 0 : index
    %c0_14 = arith.constant 0 : index
    %c0_15 = arith.constant 0 : index
    %24 = vector.load %arg6[%c0_12, %c0_13, %c0_14, %c0_15] : memref<1x8x8x8xf32, #tpu.memory_space<vmem>>, vector<1x1x8x8xf32>
    %25 = vector.shape_cast %24 : vector<1x1x8x8xf32> to vector<8x8xf32>
    %26 = vector.shape_cast %23 : vector<8x8xf32> to vector<1x1x8x8xf32>
    tpu.vector_store %arg6[%c0_12, %c0_13, %c0_14, %c0_15], %26 {strides = array<i32>} : memref<1x8x8x8xf32, #tpu.memory_space<vmem>>, vector<1x1x8x8xf32>,
    %c1_16 = arith.constant 1 : index
    %c0_17 = arith.constant 0 : index
    %27 = memref.load %arg5[%c1_16, %c0_17] : memref<8x3xf32, #tpu.memory_space<smem>>
    %28 = vector.extract_strided_slice %6 {offsets = [0, 0, 0], sizes = [1, 8, 8], strides = [1, 1, 1]} : vector<3x8x8xf32> to vector<1x8x8xf32>
    %29 = vector.shape_cast %28 : vector<1x8x8xf32> to vector<8x8xf32>
    %30 = vector.broadcast %27 : f32 to vector<8x8xf32>
    %31 = arith.mulf %30, %29 : vector<8x8xf32>
    %c1_18 = arith.constant 1 : index
    %c1_19 = arith.constant 1 : index
    %32 = memref.load %arg5[%c1_18, %c1_19] : memref<8x3xf32, #tpu.memory_space<smem>>
    %33 = vector.extract_strided_slice %6 {offsets = [1, 0, 0], sizes = [1, 8, 8], strides = [1, 1, 1]} : vector<3x8x8xf32> to vector<1x8x8xf32>
    %34 = vector.shape_cast %33 : vector<1x8x8xf32> to vector<8x8xf32>
    %35 = vector.broadcast %32 : f32 to vector<8x8xf32>
    %36 = arith.mulf %35, %34 : vector<8x8xf32>
    %37 = arith.addf %31, %36 : vector<8x8xf32>
    %c1_20 = arith.constant 1 : index
    %c2_21 = arith.constant 2 : index
    %38 = memref.load %arg5[%c1_20, %c2_21] : memref<8x3xf32, #tpu.memory_space<smem>>
    %39 = vector.extract_strided_slice %6 {offsets = [2, 0, 0], sizes = [1, 8, 8], strides = [1, 1, 1]} : vector<3x8x8xf32> to vector<1x8x8xf32>
    %40 = vector.shape_cast %39 : vector<1x8x8xf32> to vector<8x8xf32>
    %41 = vector.broadcast %38 : f32 to vector<8x8xf32>
    %42 = arith.mulf %41, %40 : vector<8x8xf32>
    %43 = arith.addf %37, %42 : vector<8x8xf32>
    %c0_22 = arith.constant 0 : index
    %c1_23 = arith.constant 1 : index
    %c0_24 = arith.constant 0 : index
    %c0_25 = arith.constant 0 : index
    %44 = vector.load %arg6[%c0_22, %c1_23, %c0_24, %c0_25] : memref<1x8x8x8xf32, #tpu.memory_space<vmem>>, vector<1x1x8x8xf32>
    %45 = vector.shape_cast %44 : vector<1x1x8x8xf32> to vector<8x8xf32>
    %46 = vector.shape_cast %43 : vector<8x8xf32> to vector<1x1x8x8xf32>
    tpu.vector_store %arg6[%c0_22, %c1_23, %c0_24, %c0_25], %46 {strides = array<i32>} : memref<1x8x8x8xf32, #tpu.memory_space<vmem>>, vector<1x1x8x8xf32>,
    %c2_26 = arith.constant 2 : index
    %c0_27 = arith.constant 0 : index
    %47 = memref.load %arg5[%c2_26, %c0_27] : memref<8x3xf32, #tpu.memory_space<smem>>
    %48 = vector.extract_strided_slice %6 {offsets = [0, 0, 0], sizes = [1, 8, 8], strides = [1, 1, 1]} : vector<3x8x8xf32> to vector<1x8x8xf32>
    %49 = vector.shape_cast %48 : vector<1x8x8xf32> to vector<8x8xf32>
    %50 = vector.broadcast %47 : f32 to vector<8x8xf32>
    %51 = arith.mulf %50, %49 : vector<8x8xf32>
    %c2_28 = arith.constant 2 : index
    %c1_29 = arith.constant 1 : index
    %52 = memref.load %arg5[%c2_28, %c1_29] : memref<8x3xf32, #tpu.memory_space<smem>>
    %53 = vector.extract_strided_slice %6 {offsets = [1, 0, 0], sizes = [1, 8, 8], strides = [1, 1, 1]} : vector<3x8x8xf32> to vector<1x8x8xf32>
    %54 = vector.shape_cast %53 : vector<1x8x8xf32> to vector<8x8xf32>
    %55 = vector.broadcast %52 : f32 to vector<8x8xf32>
    %56 = arith.mulf %55, %54 : vector<8x8xf32>
    %57 = arith.addf %51, %56 : vector<8x8xf32>
    %c2_30 = arith.constant 2 : index
    %c2_31 = arith.constant 2 : index
    %58 = memref.load %arg5[%c2_30, %c2_31] : memref<8x3xf32, #tpu.memory_space<smem>>
    %59 = vector.extract_strided_slice %6 {offsets = [2, 0, 0], sizes = [1, 8, 8], strides = [1, 1, 1]} : vector<3x8x8xf32> to vector<1x8x8xf32>
    %60 = vector.shape_cast %59 : vector<1x8x8xf32> to vector<8x8xf32>
    %61 = vector.broadcast %58 : f32 to vector<8x8xf32>
    %62 = arith.mulf %61, %60 : vector<8x8xf32>
    %63 = arith.addf %57, %62 : vector<8x8xf32>
    %c0_32 = arith.constant 0 : index
    %c2_33 = arith.constant 2 : index
    %c0_34 = arith.constant 0 : index
    %c0_35 = arith.constant 0 : index
    %64 = vector.load %arg6[%c0_32, %c2_33, %c0_34, %c0_35] : memref<1x8x8x8xf32, #tpu.memory_space<vmem>>, vector<1x1x8x8xf32>
    %65 = vector.shape_cast %64 : vector<1x1x8x8xf32> to vector<8x8xf32>
    %66 = vector.shape_cast %63 : vector<8x8xf32> to vector<1x1x8x8xf32>
    tpu.vector_store %arg6[%c0_32, %c2_33, %c0_34, %c0_35], %66 {strides = array<i32>} : memref<1x8x8x8xf32, #tpu.memory_space<vmem>>, vector<1x1x8x8xf32>,
    %c3 = arith.constant 3 : index
    %c0_36 = arith.constant 0 : index
    %67 = memref.load %arg5[%c3, %c0_36] : memref<8x3xf32, #tpu.memory_space<smem>>
    %68 = vector.extract_strided_slice %6 {offsets = [0, 0, 0], sizes = [1, 8, 8], strides = [1, 1, 1]} : vector<3x8x8xf32> to vector<1x8x8xf32>
    %69 = vector.shape_cast %68 : vector<1x8x8xf32> to vector<8x8xf32>
    %70 = vector.broadcast %67 : f32 to vector<8x8xf32>
    %71 = arith.mulf %70, %69 : vector<8x8xf32>
    %c3_37 = arith.constant 3 : index
    %c1_38 = arith.constant 1 : index
    %72 = memref.load %arg5[%c3_37, %c1_38] : memref<8x3xf32, #tpu.memory_space<smem>>
    %73 = vector.extract_strided_slice %6 {offsets = [1, 0, 0], sizes = [1, 8, 8], strides = [1, 1, 1]} : vector<3x8x8xf32> to vector<1x8x8xf32>
    %74 = vector.shape_cast %73 : vector<1x8x8xf32> to vector<8x8xf32>
    %75 = vector.broadcast %72 : f32 to vector<8x8xf32>
    %76 = arith.mulf %75, %74 : vector<8x8xf32>
    %77 = arith.addf %71, %76 : vector<8x8xf32>
    %c3_39 = arith.constant 3 : index
    %c2_40 = arith.constant 2 : index
    %78 = memref.load %arg5[%c3_39, %c2_40] : memref<8x3xf32, #tpu.memory_space<smem>>
    %79 = vector.extract_strided_slice %6 {offsets = [2, 0, 0], sizes = [1, 8, 8], strides = [1, 1, 1]} : vector<3x8x8xf32> to vector<1x8x8xf32>
    %80 = vector.shape_cast %79 : vector<1x8x8xf32> to vector<8x8xf32>
    %81 = vector.broadcast %78 : f32 to vector<8x8xf32>
    %82 = arith.mulf %81, %80 : vector<8x8xf32>
    %83 = arith.addf %77, %82 : vector<8x8xf32>
    %c0_41 = arith.constant 0 : index
    %c3_42 = arith.constant 3 : index
    %c0_43 = arith.constant 0 : index
    %c0_44 = arith.constant 0 : index
    %84 = vector.load %arg6[%c0_41, %c3_42, %c0_43, %c0_44] : memref<1x8x8x8xf32, #tpu.memory_space<vmem>>, vector<1x1x8x8xf32>
    %85 = vector.shape_cast %84 : vector<1x1x8x8xf32> to vector<8x8xf32>
    %86 = vector.shape_cast %83 : vector<8x8xf32> to vector<1x1x8x8xf32>
    tpu.vector_store %arg6[%c0_41, %c3_42, %c0_43, %c0_44], %86 {strides = array<i32>} : memref<1x8x8x8xf32, #tpu.memory_space<vmem>>, vector<1x1x8x8xf32>,
    %c4 = arith.constant 4 : index
    %c0_45 = arith.constant 0 : index
    %87 = memref.load %arg5[%c4, %c0_45] : memref<8x3xf32, #tpu.memory_space<smem>>
    %88 = vector.extract_strided_slice %6 {offsets = [0, 0, 0], sizes = [1, 8, 8], strides = [1, 1, 1]} : vector<3x8x8xf32> to vector<1x8x8xf32>
    %89 = vector.shape_cast %88 : vector<1x8x8xf32> to vector<8x8xf32>
    %90 = vector.broadcast %87 : f32 to vector<8x8xf32>
    %91 = arith.mulf %90, %89 : vector<8x8xf32>
    %c4_46 = arith.constant 4 : index
    %c1_47 = arith.constant 1 : index
    %92 = memref.load %arg5[%c4_46, %c1_47] : memref<8x3xf32, #tpu.memory_space<smem>>
    %93 = vector.extract_strided_slice %6 {offsets = [1, 0, 0], sizes = [1, 8, 8], strides = [1, 1, 1]} : vector<3x8x8xf32> to vector<1x8x8xf32>
    %94 = vector.shape_cast %93 : vector<1x8x8xf32> to vector<8x8xf32>
    %95 = vector.broadcast %92 : f32 to vector<8x8xf32>
    %96 = arith.mulf %95, %94 : vector<8x8xf32>
    %97 = arith.addf %91, %96 : vector<8x8xf32>
    %c4_48 = arith.constant 4 : index
    %c2_49 = arith.constant 2 : index
    %98 = memref.load %arg5[%c4_48, %c2_49] : memref<8x3xf32, #tpu.memory_space<smem>>
    %99 = vector.extract_strided_slice %6 {offsets = [2, 0, 0], sizes = [1, 8, 8], strides = [1, 1, 1]} : vector<3x8x8xf32> to vector<1x8x8xf32>
    %100 = vector.shape_cast %99 : vector<1x8x8xf32> to vector<8x8xf32>
    %101 = vector.broadcast %98 : f32 to vector<8x8xf32>
    %102 = arith.mulf %101, %100 : vector<8x8xf32>
    %103 = arith.addf %97, %102 : vector<8x8xf32>
    %c0_50 = arith.constant 0 : index
    %c4_51 = arith.constant 4 : index
    %c0_52 = arith.constant 0 : index
    %c0_53 = arith.constant 0 : index
    %104 = vector.load %arg6[%c0_50, %c4_51, %c0_52, %c0_53] : memref<1x8x8x8xf32, #tpu.memory_space<vmem>>, vector<1x1x8x8xf32>
    %105 = vector.shape_cast %104 : vector<1x1x8x8xf32> to vector<8x8xf32>
    %106 = vector.shape_cast %103 : vector<8x8xf32> to vector<1x1x8x8xf32>
    tpu.vector_store %arg6[%c0_50, %c4_51, %c0_52, %c0_53], %106 {strides = array<i32>} : memref<1x8x8x8xf32, #tpu.memory_space<vmem>>, vector<1x1x8x8xf32>,
    %c5 = arith.constant 5 : index
    %c0_54 = arith.constant 0 : index
    %107 = memref.load %arg5[%c5, %c0_54] : memref<8x3xf32, #tpu.memory_space<smem>>
    %108 = vector.extract_strided_slice %6 {offsets = [0, 0, 0], sizes = [1, 8, 8], strides = [1, 1, 1]} : vector<3x8x8xf32> to vector<1x8x8xf32>
    %109 = vector.shape_cast %108 : vector<1x8x8xf32> to vector<8x8xf32>
    %110 = vector.broadcast %107 : f32 to vector<8x8xf32>
    %111 = arith.mulf %110, %109 : vector<8x8xf32>
    %c5_55 = arith.constant 5 : index
    %c1_56 = arith.constant 1 : index
    %112 = memref.load %arg5[%c5_55, %c1_56] : memref<8x3xf32, #tpu.memory_space<smem>>
    %113 = vector.extract_strided_slice %6 {offsets = [1, 0, 0], sizes = [1, 8, 8], strides = [1, 1, 1]} : vector<3x8x8xf32> to vector<1x8x8xf32>
    %114 = vector.shape_cast %113 : vector<1x8x8xf32> to vector<8x8xf32>
    %115 = vector.broadcast %112 : f32 to vector<8x8xf32>
    %116 = arith.mulf %115, %114 : vector<8x8xf32>
    %117 = arith.addf %111, %116 : vector<8x8xf32>
    %c5_57 = arith.constant 5 : index
    %c2_58 = arith.constant 2 : index
    %118 = memref.load %arg5[%c5_57, %c2_58] : memref<8x3xf32, #tpu.memory_space<smem>>
    %119 = vector.extract_strided_slice %6 {offsets = [2, 0, 0], sizes = [1, 8, 8], strides = [1, 1, 1]} : vector<3x8x8xf32> to vector<1x8x8xf32>
    %120 = vector.shape_cast %119 : vector<1x8x8xf32> to vector<8x8xf32>
    %121 = vector.broadcast %118 : f32 to vector<8x8xf32>
    %122 = arith.mulf %121, %120 : vector<8x8xf32>
    %123 = arith.addf %117, %122 : vector<8x8xf32>
    %c0_59 = arith.constant 0 : index
    %c5_60 = arith.constant 5 : index
    %c0_61 = arith.constant 0 : index
    %c0_62 = arith.constant 0 : index
    %124 = vector.load %arg6[%c0_59, %c5_60, %c0_61, %c0_62] : memref<1x8x8x8xf32, #tpu.memory_space<vmem>>, vector<1x1x8x8xf32>
    %125 = vector.shape_cast %124 : vector<1x1x8x8xf32> to vector<8x8xf32>
    %126 = vector.shape_cast %123 : vector<8x8xf32> to vector<1x1x8x8xf32>
    tpu.vector_store %arg6[%c0_59, %c5_60, %c0_61, %c0_62], %126 {strides = array<i32>} : memref<1x8x8x8xf32, #tpu.memory_space<vmem>>, vector<1x1x8x8xf32>,
    %c6 = arith.constant 6 : index
    %c0_63 = arith.constant 0 : index
    %127 = memref.load %arg5[%c6, %c0_63] : memref<8x3xf32, #tpu.memory_space<smem>>
    %128 = vector.extract_strided_slice %6 {offsets = [0, 0, 0], sizes = [1, 8, 8], strides = [1, 1, 1]} : vector<3x8x8xf32> to vector<1x8x8xf32>
    %129 = vector.shape_cast %128 : vector<1x8x8xf32> to vector<8x8xf32>
    %130 = vector.broadcast %127 : f32 to vector<8x8xf32>
    %131 = arith.mulf %130, %129 : vector<8x8xf32>
    %c6_64 = arith.constant 6 : index
    %c1_65 = arith.constant 1 : index
    %132 = memref.load %arg5[%c6_64, %c1_65] : memref<8x3xf32, #tpu.memory_space<smem>>
    %133 = vector.extract_strided_slice %6 {offsets = [1, 0, 0], sizes = [1, 8, 8], strides = [1, 1, 1]} : vector<3x8x8xf32> to vector<1x8x8xf32>
    %134 = vector.shape_cast %133 : vector<1x8x8xf32> to vector<8x8xf32>
    %135 = vector.broadcast %132 : f32 to vector<8x8xf32>
    %136 = arith.mulf %135, %134 : vector<8x8xf32>
    %137 = arith.addf %131, %136 : vector<8x8xf32>
    %c6_66 = arith.constant 6 : index
    %c2_67 = arith.constant 2 : index
    %138 = memref.load %arg5[%c6_66, %c2_67] : memref<8x3xf32, #tpu.memory_space<smem>>
    %139 = vector.extract_strided_slice %6 {offsets = [2, 0, 0], sizes = [1, 8, 8], strides = [1, 1, 1]} : vector<3x8x8xf32> to vector<1x8x8xf32>
    %140 = vector.shape_cast %139 : vector<1x8x8xf32> to vector<8x8xf32>
    %141 = vector.broadcast %138 : f32 to vector<8x8xf32>
    %142 = arith.mulf %141, %140 : vector<8x8xf32>
    %143 = arith.addf %137, %142 : vector<8x8xf32>
    %c0_68 = arith.constant 0 : index
    %c6_69 = arith.constant 6 : index
    %c0_70 = arith.constant 0 : index
    %c0_71 = arith.constant 0 : index
    %144 = vector.load %arg6[%c0_68, %c6_69, %c0_70, %c0_71] : memref<1x8x8x8xf32, #tpu.memory_space<vmem>>, vector<1x1x8x8xf32>
    %145 = vector.shape_cast %144 : vector<1x1x8x8xf32> to vector<8x8xf32>
    %146 = vector.shape_cast %143 : vector<8x8xf32> to vector<1x1x8x8xf32>
    tpu.vector_store %arg6[%c0_68, %c6_69, %c0_70, %c0_71], %146 {strides = array<i32>} : memref<1x8x8x8xf32, #tpu.memory_space<vmem>>, vector<1x1x8x8xf32>,
    %c7 = arith.constant 7 : index
    %c0_72 = arith.constant 0 : index
    %147 = memref.load %arg5[%c7, %c0_72] : memref<8x3xf32, #tpu.memory_space<smem>>
    %148 = vector.extract_strided_slice %6 {offsets = [0, 0, 0], sizes = [1, 8, 8], strides = [1, 1, 1]} : vector<3x8x8xf32> to vector<1x8x8xf32>
    %149 = vector.shape_cast %148 : vector<1x8x8xf32> to vector<8x8xf32>
    %150 = vector.broadcast %147 : f32 to vector<8x8xf32>
    %151 = arith.mulf %150, %149 : vector<8x8xf32>
    %c7_73 = arith.constant 7 : index
    %c1_74 = arith.constant 1 : index
    %152 = memref.load %arg5[%c7_73, %c1_74] : memref<8x3xf32, #tpu.memory_space<smem>>
    %153 = vector.extract_strided_slice %6 {offsets = [1, 0, 0], sizes = [1, 8, 8], strides = [1, 1, 1]} : vector<3x8x8xf32> to vector<1x8x8xf32>
    %154 = vector.shape_cast %153 : vector<1x8x8xf32> to vector<8x8xf32>
    %155 = vector.broadcast %152 : f32 to vector<8x8xf32>
    %156 = arith.mulf %155, %154 : vector<8x8xf32>
    %157 = arith.addf %151, %156 : vector<8x8xf32>
    %c7_75 = arith.constant 7 : index
    %c2_76 = arith.constant 2 : index
    %158 = memref.load %arg5[%c7_75, %c2_76] : memref<8x3xf32, #tpu.memory_space<smem>>
    %159 = vector.extract_strided_slice %6 {offsets = [2, 0, 0], sizes = [1, 8, 8], strides = [1, 1, 1]} : vector<3x8x8xf32> to vector<1x8x8xf32>
    %160 = vector.shape_cast %159 : vector<1x8x8xf32> to vector<8x8xf32>
    %161 = vector.broadcast %158 : f32 to vector<8x8xf32>
    %162 = arith.mulf %161, %160 : vector<8x8xf32>
    %163 = arith.addf %157, %162 : vector<8x8xf32>
    %c0_77 = arith.constant 0 : index
    %c7_78 = arith.constant 7 : index
    %c0_79 = arith.constant 0 : index
    %c0_80 = arith.constant 0 : index
    %164 = vector.load %arg6[%c0_77, %c7_78, %c0_79, %c0_80] : memref<1x8x8x8xf32, #tpu.memory_space<vmem>>, vector<1x1x8x8xf32>
    %165 = vector.shape_cast %164 : vector<1x1x8x8xf32> to vector<8x8xf32>
    %166 = vector.shape_cast %163 : vector<8x8xf32> to vector<1x1x8x8xf32>
    tpu.vector_store %arg6[%c0_77, %c7_78, %c0_79, %c0_80], %166 {strides = array<i32>} : memref<1x8x8x8xf32, #tpu.memory_space<vmem>>, vector<1x1x8x8xf32>,
    return
  }
  func.func @transform_0(%arg0: i32, %arg1: i32) -> (i32, i32, i32) {
    %c0_i32 = arith.constant 0 : i32
    %c0_i32_0 = arith.constant 0 : i32
    %c0_i32_1 = arith.constant 0 : i32
    return %arg0, %c0_i32, %c0_i32_0 : i32, i32, i32
  }
  func.func @transform_1(%arg0: i32, %arg1: i32) -> (i32, i32) {
    %c0_i32 = arith.constant 0 : i32
    %c0_i32_0 = arith.constant 0 : i32
    return %c0_i32, %arg1 : i32, i32
  }
  func.func @transform_2(%arg0: i32, %arg1: i32) -> (i32, i32, i32) {
    %c0_i32 = arith.constant 0 : i32
    %c0_i32_0 = arith.constant 0 : i32
    %c0_i32_1 = arith.constant 0 : i32
    %c0_i32_2 = arith.constant 0 : i32
    return %c0_i32, %c0_i32_0, %c0_i32_1 : i32, i32, i32
  }
  func.func @transform_3(%arg0: i32, %arg1: i32) -> (i32, i32) {
    %c0_i32 = arith.constant 0 : i32
    %c0_i32_0 = arith.constant 0 : i32
    %c0_i32_1 = arith.constant 0 : i32
    return %c0_i32, %c0_i32_0 : i32, i32
  }
  func.func @transform_4(%arg0: i32, %arg1: i32) -> (i32, i32, i32, i32) {
    %c0_i32 = arith.constant 0 : i32
    %c0_i32_0 = arith.constant 0 : i32
    %c0_i32_1 = arith.constant 0 : i32
    return %arg0, %c0_i32, %c0_i32_0, %arg1 : i32, i32, i32, i32
  }
}

module attributes {stable_mosaic.version = 11 : i64} {
  func.func @kernel(%arg0: i32, %arg1: i32, %arg2: memref<1x48x16xf32, #tpu.memory_space<vmem>>, %arg3: memref<16x8xf32, #tpu.memory_space<vmem>>, %arg4: memref<3x8x16xf32, #tpu.memory_space<vmem>>, %arg5: memref<8x3xf32, #tpu.memory_space<smem>>, %arg6: memref<1x8x8x8xf32, #tpu.memory_space<vmem>>) attributes {dimension_semantics = [#tpu.dimension_semantics<parallel>, #tpu.dimension_semantics<parallel>], iteration_bounds = array<i64: 2, 1>, scalar_prefetch = 0 : i64, scratch_operands = 0 : i64, tpu.core_type = #tpu.core_type<tc>, window_params = [{transform_indices = @transform_0, window_bounds = array<i64: 1, 48, 16>}, {transform_indices = @transform_1, window_bounds = array<i64: 16, 8>}, {pipeline_mode = #tpu.pipeline_mode<synchronous>, transform_indices = @transform_2, window_bounds = array<i64: 3, 8, 16>}, {transform_indices = @transform_3, window_bounds = array<i64: 8, 3>}, {transform_indices = @transform_4, window_bounds = array<i64: 1, 8, 8, 8>}]} {
    %c0 = arith.constant 0 : index
    %c0_0 = arith.constant 0 : index
    %c0_1 = arith.constant 0 : index
    %0 = vector.load %arg2[%c0, %c0_0, %c0_1] : memref<1x48x16xf32, #tpu.memory_space<vmem>>, vector<1x48x16xf32>
    %1 = vector.shape_cast %0 : vector<1x48x16xf32> to vector<48x16xf32>
    %c0_2 = arith.constant 0 : index
    %c0_3 = arith.constant 0 : index
    %2 = vector.load %arg3[%c0_2, %c0_3] : memref<16x8xf32, #tpu.memory_space<vmem>>, vector<16x8xf32>
    %cst = arith.constant dense<0.000000e+00> : vector<48x8xf32>
    %3 = tpu.matmul %1, %2, %cst {dimension_numbers = #tpu.dot_dimension_numbers<[1], [0], [0], [1], [0, 0, 1, 1], [], []>} : vector<48x16xf32>, vector<16x8xf32>, vector<48x8xf32> -> vector<48x8xf32>
    %4 = vector.shape_cast %3 : vector<48x8xf32> to vector<3x16x8xf32>
    %c0_4 = arith.constant 0 : index
    %c0_5 = arith.constant 0 : index
    %c0_6 = arith.constant 0 : index
    %5 = vector.load %arg4[%c0_4, %c0_5, %c0_6] : memref<3x8x16xf32, #tpu.memory_space<vmem>>, vector<3x8x16xf32>
    %cst_7 = arith.constant dense<0.000000e+00> : vector<3x8x8xf32>
    %6 = tpu.matmul %5, %4, %cst_7 {dimension_numbers = #tpu.dot_dimension_numbers<[2], [1], [1], [2], [0, 0, 0, 1, 1, 2], [0], [0]>} : vector<3x8x16xf32>, vector<3x16x8xf32>, vector<3x8x8xf32> -> vector<3x8x8xf32>
    %c0_8 = arith.constant 0 : index
    %c0_9 = arith.constant 0 : index
    %7 = memref.load %arg5[%c0_8, %c0_9] : memref<8x3xf32, #tpu.memory_space<smem>>
    %8 = vector.extract_strided_slice %6 {offsets = [0, 0, 0], sizes = [1, 8, 8], strides = [1, 1, 1]} : vector<3x8x8xf32> to vector<1x8x8xf32>
    %9 = vector.shape_cast %8 : vector<1x8x8xf32> to vector<8x8xf32>
    %10 = vector.broadcast %7 : f32 to vector<8x8xf32>
    %11 = arith.mulf %10, %9 : vector<8x8xf32>
    %c0_10 = arith.constant 0 : index
    %c1 = arith.constant 1 : index
    %12 = memref.load %arg5[%c0_10, %c1] : memref<8x3xf32, #tpu.memory_space<smem>>
    %13 = vector.extract_strided_slice %6 {offsets = [1, 0, 0], sizes = [1, 8, 8], strides = [1, 1, 1]} : vector<3x8x8xf32> to vector<1x8x8xf32>
    %14 = vector.shape_cast %13 : vector<1x8x8xf32> to vector<8x8xf32>
    %15 = vector.broadcast %12 : f32 to vector<8x8xf32>
    %16 = arith.mulf %15, %14 : vector<8x8xf32>
    %17 = arith.addf %11, %16 : vector<8x8xf32>
    %c0_11 = arith.constant 0 : index
    %c2 = arith.constant 2 : index
    %18 = memref.load %arg5[%c0_11, %c2] : memref<8x3xf32, #tpu.memory_space<smem>>
    %19 = vector.extract_strided_slice %6 {offsets = [2, 0, 0], sizes = [1, 8, 8], strides = [1, 1, 1]} : vector<3x8x8xf32> to vector<1x8x8xf32>
    %20 = vector.shape_cast %19 : vector<1x8x8xf32> to vector<8x8xf32>
    %21 = vector.broadcast %18 : f32 to vector<8x8xf32>
    %22 = arith.mulf %21, %20 : vector<8x8xf32>
    %23 = arith.addf %17, %22 : vector<8x8xf32>
    %c0_12 = arith.constant 0 : index
    %c0_13 = arith.constant 0 : index
    %c0_14 = arith.constant 0 : index
    %c0_15 = arith.constant 0 : index
    %24 = vector.load %arg6[%c0_12, %c0_13, %c0_14, %c0_15] : memref<1x8x8x8xf32, #tpu.memory_space<vmem>>, vector<1x1x8x8xf32>
    %25 = vector.shape_cast %24 : vector<1x1x8x8xf32> to vector<8x8xf32>
    %26 = vector.shape_cast %23 : vector<8x8xf32> to vector<1x1x8x8xf32>
    tpu.vector_store %arg6[%c0_12, %c0_13, %c0_14, %c0_15], %26 {strides = array<i32>} : memref<1x8x8x8xf32, #tpu.memory_space<vmem>>, vector<1x1x8x8xf32>,
    %c1_16 = arith.constant 1 : index
    %c0_17 = arith.constant 0 : index
    %27 = memref.load %arg5[%c1_16, %c0_17] : memref<8x3xf32, #tpu.memory_space<smem>>
    %28 = vector.extract_strided_slice %6 {offsets = [0, 0, 0], sizes = [1, 8, 8], strides = [1, 1, 1]} : vector<3x8x8xf32> to vector<1x8x8xf32>
    %29 = vector.shape_cast %28 : vector<1x8x8xf32> to vector<8x8xf32>
    %30 = vector.broadcast %27 : f32 to vector<8x8xf32>
    %31 = arith.mulf %30, %29 : vector<8x8xf32>
    %c1_18 = arith.constant 1 : index
    %c1_19 = arith.constant 1 : index
    %32 = memref.load %arg5[%c1_18, %c1_19] : memref<8x3xf32, #tpu.memory_space<smem>>
    %33 = vector.extract_strided_slice %6 {offsets = [1, 0, 0], sizes = [1, 8, 8], strides = [1, 1, 1]} : vector<3x8x8xf32> to vector<1x8x8xf32>
    %34 = vector.shape_cast %33 : vector<1x8x8xf32> to vector<8x8xf32>
    %35 = vector.broadcast %32 : f32 to vector<8x8xf32>
    %36 = arith.mulf %35, %34 : vector<8x8xf32>
    %37 = arith.addf %31, %36 : vector<8x8xf32>
    %c1_20 = arith.constant 1 : index
    %c2_21 = arith.constant 2 : index
    %38 = memref.load %arg5[%c1_20, %c2_21] : memref<8x3xf32, #tpu.memory_space<smem>>
    %39 = vector.extract_strided_slice %6 {offsets = [2, 0, 0], sizes = [1, 8, 8], strides = [1, 1, 1]} : vector<3x8x8xf32> to vector<1x8x8xf32>
    %40 = vector.shape_cast %39 : vector<1x8x8xf32> to vector<8x8xf32>
    %41 = vector.broadcast %38 : f32 to vector<8x8xf32>
    %42 = arith.mulf %41, %40 : vector<8x8xf32>
    %43 = arith.addf %37, %42 : vector<8x8xf32>
    %c0_22 = arith.constant 0 : index
    %c1_23 = arith.constant 1 : index
    %c0_24 = arith.constant 0 : index
    %c0_25 = arith.constant 0 : index
    %44 = vector.load %arg6[%c0_22, %c1_23, %c0_24, %c0_25] : memref<1x8x8x8xf32, #tpu.memory_space<vmem>>, vector<1x1x8x8xf32>
    %45 = vector.shape_cast %44 : vector<1x1x8x8xf32> to vector<8x8xf32>
    %46 = vector.shape_cast %43 : vector<8x8xf32> to vector<1x1x8x8xf32>
    tpu.vector_store %arg6[%c0_22, %c1_23, %c0_24, %c0_25], %46 {strides = array<i32>} : memref<1x8x8x8xf32, #tpu.memory_space<vmem>>, vector<1x1x8x8xf32>,
    %c2_26 = arith.constant 2 : index
    %c0_27 = arith.constant 0 : index
    %47 = memref.load %arg5[%c2_26, %c0_27] : memref<8x3xf32, #tpu.memory_space<smem>>
    %48 = vector.extract_strided_slice %6 {offsets = [0, 0, 0], sizes = [1, 8, 8], strides = [1, 1, 1]} : vector<3x8x8xf32> to vector<1x8x8xf32>
    %49 = vector.shape_cast %48 : vector<1x8x8xf32> to vector<8x8xf32>
    %50 = vector.broadcast %47 : f32 to vector<8x8xf32>
    %51 = arith.mulf %50, %49 : vector<8x8xf32>
    %c2_28 = arith.constant 2 : index
    %c1_29 = arith.constant 1 : index
    %52 = memref.load %arg5[%c2_28, %c1_29] : memref<8x3xf32, #tpu.memory_space<smem>>
    %53 = vector.extract_strided_slice %6 {offsets = [1, 0, 0], sizes = [1, 8, 8], strides = [1, 1, 1]} : vector<3x8x8xf32> to vector<1x8x8xf32>
    %54 = vector.shape_cast %53 : vector<1x8x8xf32> to vector<8x8xf32>
    %55 = vector.broadcast %52 : f32 to vector<8x8xf32>
    %56 = arith.mulf %55, %54 : vector<8x8xf32>
    %57 = arith.addf %51, %56 : vector<8x8xf32>
    %c2_30 = arith.constant 2 : index
    %c2_31 = arith.constant 2 : index
    %58 = memref.load %arg5[%c2_30, %c2_31] : memref<8x3xf32, #tpu.memory_space<smem>>
    %59 = vector.extract_strided_slice %6 {offsets = [2, 0, 0], sizes = [1, 8, 8], strides = [1, 1, 1]} : vector<3x8x8xf32> to vector<1x8x8xf32>
    %60 = vector.shape_cast %59 : vector<1x8x8xf32> to vector<8x8xf32>
    %61 = vector.broadcast %58 : f32 to vector<8x8xf32>
    %62 = arith.mulf %61, %60 : vector<8x8xf32>
    %63 = arith.addf %57, %62 : vector<8x8xf32>
    %c0_32 = arith.constant 0 : index
    %c2_33 = arith.constant 2 : index
    %c0_34 = arith.constant 0 : index
    %c0_35 = arith.constant 0 : index
    %64 = vector.load %arg6[%c0_32, %c2_33, %c0_34, %c0_35] : memref<1x8x8x8xf32, #tpu.memory_space<vmem>>, vector<1x1x8x8xf32>
    %65 = vector.shape_cast %64 : vector<1x1x8x8xf32> to vector<8x8xf32>
    %66 = vector.shape_cast %63 : vector<8x8xf32> to vector<1x1x8x8xf32>
    tpu.vector_store %arg6[%c0_32, %c2_33, %c0_34, %c0_35], %66 {strides = array<i32>} : memref<1x8x8x8xf32, #tpu.memory_space<vmem>>, vector<1x1x8x8xf32>,
    %c3 = arith.constant 3 : index
    %c0_36 = arith.constant 0 : index
    %67 = memref.load %arg5[%c3, %c0_36] : memref<8x3xf32, #tpu.memory_space<smem>>
    %68 = vector.extract_strided_slice %6 {offsets = [0, 0, 0], sizes = [1, 8, 8], strides = [1, 1, 1]} : vector<3x8x8xf32> to vector<1x8x8xf32>
    %69 = vector.shape_cast %68 : vector<1x8x8xf32> to vector<8x8xf32>
    %70 = vector.broadcast %67 : f32 to vector<8x8xf32>
    %71 = arith.mulf %70, %69 : vector<8x8xf32>
    %c3_37 = arith.constant 3 : index
    %c1_38 = arith.constant 1 : index
    %72 = memref.load %arg5[%c3_37, %c1_38] : memref<8x3xf32, #tpu.memory_space<smem>>
    %73 = vector.extract_strided_slice %6 {offsets = [1, 0, 0], sizes = [1, 8, 8], strides = [1, 1, 1]} : vector<3x8x8xf32> to vector<1x8x8xf32>
    %74 = vector.shape_cast %73 : vector<1x8x8xf32> to vector<8x8xf32>
    %75 = vector.broadcast %72 : f32 to vector<8x8xf32>
    %76 = arith.mulf %75, %74 : vector<8x8xf32>
    %77 = arith.addf %71, %76 : vector<8x8xf32>
    %c3_39 = arith.constant 3 : index
    %c2_40 = arith.constant 2 : index
    %78 = memref.load %arg5[%c3_39, %c2_40] : memref<8x3xf32, #tpu.memory_space<smem>>
    %79 = vector.extract_strided_slice %6 {offsets = [2, 0, 0], sizes = [1, 8, 8], strides = [1, 1, 1]} : vector<3x8x8xf32> to vector<1x8x8xf32>
    %80 = vector.shape_cast %79 : vector<1x8x8xf32> to vector<8x8xf32>
    %81 = vector.broadcast %78 : f32 to vector<8x8xf32>
    %82 = arith.mulf %81, %80 : vector<8x8xf32>
    %83 = arith.addf %77, %82 : vector<8x8xf32>
    %c0_41 = arith.constant 0 : index
    %c3_42 = arith.constant 3 : index
    %c0_43 = arith.constant 0 : index
    %c0_44 = arith.constant 0 : index
    %84 = vector.load %arg6[%c0_41, %c3_42, %c0_43, %c0_44] : memref<1x8x8x8xf32, #tpu.memory_space<vmem>>, vector<1x1x8x8xf32>
    %85 = vector.shape_cast %84 : vector<1x1x8x8xf32> to vector<8x8xf32>
    %86 = vector.shape_cast %83 : vector<8x8xf32> to vector<1x1x8x8xf32>
    tpu.vector_store %arg6[%c0_41, %c3_42, %c0_43, %c0_44], %86 {strides = array<i32>} : memref<1x8x8x8xf32, #tpu.memory_space<vmem>>, vector<1x1x8x8xf32>,
    %c4 = arith.constant 4 : index
    %c0_45 = arith.constant 0 : index
    %87 = memref.load %arg5[%c4, %c0_45] : memref<8x3xf32, #tpu.memory_space<smem>>
    %88 = vector.extract_strided_slice %6 {offsets = [0, 0, 0], sizes = [1, 8, 8], strides = [1, 1, 1]} : vector<3x8x8xf32> to vector<1x8x8xf32>
    %89 = vector.shape_cast %88 : vector<1x8x8xf32> to vector<8x8xf32>
    %90 = vector.broadcast %87 : f32 to vector<8x8xf32>
    %91 = arith.mulf %90, %89 : vector<8x8xf32>
    %c4_46 = arith.constant 4 : index
    %c1_47 = arith.constant 1 : index
    %92 = memref.load %arg5[%c4_46, %c1_47] : memref<8x3xf32, #tpu.memory_space<smem>>
    %93 = vector.extract_strided_slice %6 {offsets = [1, 0, 0], sizes = [1, 8, 8], strides = [1, 1, 1]} : vector<3x8x8xf32> to vector<1x8x8xf32>
    %94 = vector.shape_cast %93 : vector<1x8x8xf32> to vector<8x8xf32>
    %95 = vector.broadcast %92 : f32 to vector<8x8xf32>
    %96 = arith.mulf %95, %94 : vector<8x8xf32>
    %97 = arith.addf %91, %96 : vector<8x8xf32>
    %c4_48 = arith.constant 4 : index
    %c2_49 = arith.constant 2 : index
    %98 = memref.load %arg5[%c4_48, %c2_49] : memref<8x3xf32, #tpu.memory_space<smem>>
    %99 = vector.extract_strided_slice %6 {offsets = [2, 0, 0], sizes = [1, 8, 8], strides = [1, 1, 1]} : vector<3x8x8xf32> to vector<1x8x8xf32>
    %100 = vector.shape_cast %99 : vector<1x8x8xf32> to vector<8x8xf32>
    %101 = vector.broadcast %98 : f32 to vector<8x8xf32>
    %102 = arith.mulf %101, %100 : vector<8x8xf32>
    %103 = arith.addf %97, %102 : vector<8x8xf32>
    %c0_50 = arith.constant 0 : index
    %c4_51 = arith.constant 4 : index
    %c0_52 = arith.constant 0 : index
    %c0_53 = arith.constant 0 : index
    %104 = vector.load %arg6[%c0_50, %c4_51, %c0_52, %c0_53] : memref<1x8x8x8xf32, #tpu.memory_space<vmem>>, vector<1x1x8x8xf32>
    %105 = vector.shape_cast %104 : vector<1x1x8x8xf32> to vector<8x8xf32>
    %106 = vector.shape_cast %103 : vector<8x8xf32> to vector<1x1x8x8xf32>
    tpu.vector_store %arg6[%c0_50, %c4_51, %c0_52, %c0_53], %106 {strides = array<i32>} : memref<1x8x8x8xf32, #tpu.memory_space<vmem>>, vector<1x1x8x8xf32>,
    %c5 = arith.constant 5 : index
    %c0_54 = arith.constant 0 : index
    %107 = memref.load %arg5[%c5, %c0_54] : memref<8x3xf32, #tpu.memory_space<smem>>
    %108 = vector.extract_strided_slice %6 {offsets = [0, 0, 0], sizes = [1, 8, 8], strides = [1, 1, 1]} : vector<3x8x8xf32> to vector<1x8x8xf32>
    %109 = vector.shape_cast %108 : vector<1x8x8xf32> to vector<8x8xf32>
    %110 = vector.broadcast %107 : f32 to vector<8x8xf32>
    %111 = arith.mulf %110, %109 : vector<8x8xf32>
    %c5_55 = arith.constant 5 : index
    %c1_56 = arith.constant 1 : index
    %112 = memref.load %arg5[%c5_55, %c1_56] : memref<8x3xf32, #tpu.memory_space<smem>>
    %113 = vector.extract_strided_slice %6 {offsets = [1, 0, 0], sizes = [1, 8, 8], strides = [1, 1, 1]} : vector<3x8x8xf32> to vector<1x8x8xf32>
    %114 = vector.shape_cast %113 : vector<1x8x8xf32> to vector<8x8xf32>
    %115 = vector.broadcast %112 : f32 to vector<8x8xf32>
    %116 = arith.mulf %115, %114 : vector<8x8xf32>
    %117 = arith.addf %111, %116 : vector<8x8xf32>
    %c5_57 = arith.constant 5 : index
    %c2_58 = arith.constant 2 : index
    %118 = memref.load %arg5[%c5_57, %c2_58] : memref<8x3xf32, #tpu.memory_space<smem>>
    %119 = vector.extract_strided_slice %6 {offsets = [2, 0, 0], sizes = [1, 8, 8], strides = [1, 1, 1]} : vector<3x8x8xf32> to vector<1x8x8xf32>
    %120 = vector.shape_cast %119 : vector<1x8x8xf32> to vector<8x8xf32>
    %121 = vector.broadcast %118 : f32 to vector<8x8xf32>
    %122 = arith.mulf %121, %120 : vector<8x8xf32>
    %123 = arith.addf %117, %122 : vector<8x8xf32>
    %c0_59 = arith.constant 0 : index
    %c5_60 = arith.constant 5 : index
    %c0_61 = arith.constant 0 : index
    %c0_62 = arith.constant 0 : index
    %124 = vector.load %arg6[%c0_59, %c5_60, %c0_61, %c0_62] : memref<1x8x8x8xf32, #tpu.memory_space<vmem>>, vector<1x1x8x8xf32>
    %125 = vector.shape_cast %124 : vector<1x1x8x8xf32> to vector<8x8xf32>
    %126 = vector.shape_cast %123 : vector<8x8xf32> to vector<1x1x8x8xf32>
    tpu.vector_store %arg6[%c0_59, %c5_60, %c0_61, %c0_62], %126 {strides = array<i32>} : memref<1x8x8x8xf32, #tpu.memory_space<vmem>>, vector<1x1x8x8xf32>,
    %c6 = arith.constant 6 : index
    %c0_63 = arith.constant 0 : index
    %127 = memref.load %arg5[%c6, %c0_63] : memref<8x3xf32, #tpu.memory_space<smem>>
    %128 = vector.extract_strided_slice %6 {offsets = [0, 0, 0], sizes = [1, 8, 8], strides = [1, 1, 1]} : vector<3x8x8xf32> to vector<1x8x8xf32>
    %129 = vector.shape_cast %128 : vector<1x8x8xf32> to vector<8x8xf32>
    %130 = vector.broadcast %127 : f32 to vector<8x8xf32>
    %131 = arith.mulf %130, %129 : vector<8x8xf32>
    %c6_64 = arith.constant 6 : index
    %c1_65 = arith.constant 1 : index
    %132 = memref.load %arg5[%c6_64, %c1_65] : memref<8x3xf32, #tpu.memory_space<smem>>
    %133 = vector.extract_strided_slice %6 {offsets = [1, 0, 0], sizes = [1, 8, 8], strides = [1, 1, 1]} : vector<3x8x8xf32> to vector<1x8x8xf32>
    %134 = vector.shape_cast %133 : vector<1x8x8xf32> to vector<8x8xf32>
    %135 = vector.broadcast %132 : f32 to vector<8x8xf32>
    %136 = arith.mulf %135, %134 : vector<8x8xf32>
    %137 = arith.addf %131, %136 : vector<8x8xf32>
    %c6_66 = arith.constant 6 : index
    %c2_67 = arith.constant 2 : index
    %138 = memref.load %arg5[%c6_66, %c2_67] : memref<8x3xf32, #tpu.memory_space<smem>>
    %139 = vector.extract_strided_slice %6 {offsets = [2, 0, 0], sizes = [1, 8, 8], strides = [1, 1, 1]} : vector<3x8x8xf32> to vector<1x8x8xf32>
    %140 = vector.shape_cast %139 : vector<1x8x8xf32> to vector<8x8xf32>
    %141 = vector.broadcast %138 : f32 to vector<8x8xf32>
    %142 = arith.mulf %141, %140 : vector<8x8xf32>
    %143 = arith.addf %137, %142 : vector<8x8xf32>
    %c0_68 = arith.constant 0 : index
    %c6_69 = arith.constant 6 : index
    %c0_70 = arith.constant 0 : index
    %c0_71 = arith.constant 0 : index
    %144 = vector.load %arg6[%c0_68, %c6_69, %c0_70, %c0_71] : memref<1x8x8x8xf32, #tpu.memory_space<vmem>>, vector<1x1x8x8xf32>
    %145 = vector.shape_cast %144 : vector<1x1x8x8xf32> to vector<8x8xf32>
    %146 = vector.shape_cast %143 : vector<8x8xf32> to vector<1x1x8x8xf32>
    tpu.vector_store %arg6[%c0_68, %c6_69, %c0_70, %c0_71], %146 {strides = array<i32>} : memref<1x8x8x8xf32, #tpu.memory_space<vmem>>, vector<1x1x8x8xf32>,
    %c7 = arith.constant 7 : index
    %c0_72 = arith.constant 0 : index
    %147 = memref.load %arg5[%c7, %c0_72] : memref<8x3xf32, #tpu.memory_space<smem>>
    %148 = vector.extract_strided_slice %6 {offsets = [0, 0, 0], sizes = [1, 8, 8], strides = [1, 1, 1]} : vector<3x8x8xf32> to vector<1x8x8xf32>
    %149 = vector.shape_cast %148 : vector<1x8x8xf32> to vector<8x8xf32>
    %150 = vector.broadcast %147 : f32 to vector<8x8xf32>
    %151 = arith.mulf %150, %149 : vector<8x8xf32>
    %c7_73 = arith.constant 7 : index
    %c1_74 = arith.constant 1 : index
    %152 = memref.load %arg5[%c7_73, %c1_74] : memref<8x3xf32, #tpu.memory_space<smem>>
    %153 = vector.extract_strided_slice %6 {offsets = [1, 0, 0], sizes = [1, 8, 8], strides = [1, 1, 1]} : vector<3x8x8xf32> to vector<1x8x8xf32>
    %154 = vector.shape_cast %153 : vector<1x8x8xf32> to vector<8x8xf32>
    %155 = vector.broadcast %152 : f32 to vector<8x8xf32>
    %156 = arith.mulf %155, %154 : vector<8x8xf32>
    %157 = arith.addf %151, %156 : vector<8x8xf32>
    %c7_75 = arith.constant 7 : index
    %c2_76 = arith.constant 2 : index
    %158 = memref.load %arg5[%c7_75, %c2_76] : memref<8x3xf32, #tpu.memory_space<smem>>
    %159 = vector.extract_strided_slice %6 {offsets = [2, 0, 0], sizes = [1, 8, 8], strides = [1, 1, 1]} : vector<3x8x8xf32> to vector<1x8x8xf32>
    %160 = vector.shape_cast %159 : vector<1x8x8xf32> to vector<8x8xf32>
    %161 = vector.broadcast %158 : f32 to vector<8x8xf32>
    %162 = arith.mulf %161, %160 : vector<8x8xf32>
    %163 = arith.addf %157, %162 : vector<8x8xf32>
    %c0_77 = arith.constant 0 : index
    %c7_78 = arith.constant 7 : index
    %c0_79 = arith.constant 0 : index
    %c0_80 = arith.constant 0 : index
    %164 = vector.load %arg6[%c0_77, %c7_78, %c0_79, %c0_80] : memref<1x8x8x8xf32, #tpu.memory_space<vmem>>, vector<1x1x8x8xf32>
    %165 = vector.shape_cast %164 : vector<1x1x8x8xf32> to vector<8x8xf32>
    %166 = vector.shape_cast %163 : vector<8x8xf32> to vector<1x1x8x8xf32>
    tpu.vector_store %arg6[%c0_77, %c7_78, %c0_79, %c0_80], %166 {strides = array<i32>} : memref<1x8x8x8xf32, #tpu.memory_space<vmem>>, vector<1x1x8x8xf32>,
    return
  }
  func.func @transform_0(%arg0: i32, %arg1: i32) -> (i32, i32, i32) {
    %c0_i32 = arith.constant 0 : i32
    %c0_i32_0 = arith.constant 0 : i32
    %c0_i32_1 = arith.constant 0 : i32
    return %arg0, %c0_i32, %c0_i32_0 : i32, i32, i32
  }
  func.func @transform_1(%arg0: i32, %arg1: i32) -> (i32, i32) {
    %c0_i32 = arith.constant 0 : i32
    %c0_i32_0 = arith.constant 0 : i32
    return %c0_i32, %arg1 : i32, i32
  }
  func.func @transform_2(%arg0: i32, %arg1: i32) -> (i32, i32, i32) {
    %c0_i32 = arith.constant 0 : i32
    %c0_i32_0 = arith.constant 0 : i32
    %c0_i32_1 = arith.constant 0 : i32
    %c0_i32_2 = arith.constant 0 : i32
    return %c0_i32, %c0_i32_0, %c0_i32_1 : i32, i32, i32
  }
  func.func @transform_3(%arg0: i32, %arg1: i32) -> (i32, i32) {
    %c0_i32 = arith.constant 0 : i32
    %c0_i32_0 = arith.constant 0 : i32
    %c0_i32_1 = arith.constant 0 : i32
    return %c0_i32, %c0_i32_0 : i32, i32
  }
  func.func @transform_4(%arg0: i32, %arg1: i32) -> (i32, i32, i32, i32) {
    %c0_i32 = arith.constant 0 : i32
    %c0_i32_0 = arith.constant 0 : i32
    %c0_i32_1 = arith.constant 0 : i32
    return %arg0, %c0_i32, %c0_i32_0, %arg1 : i32, i32, i32, i32
  }
}

</mosaic_0001>

<llo_original>
// kernel: tpu_custom_call.1
$region0: #{tpu_custom_call.1}
  #allocation0 [shape = 'u32[]', space=smem, size = 0x4, offset = 0x4, fixed_abs, tag = 'smem constant byte address 0x4 - core index']
  #allocation1 [shape = 'u32[72,128]{1,0:T(1,128)}', space=vmem, size = 0x9000, scoped, tag = 'internal scratch']
  %s0 = inlined_call_operand.vmem [shape: f32[2,48,16], index: 0, kind: input, shape index: {}]
  %s1 = inlined_call_operand.vmem [shape: f32[16,8], index: 1, kind: input, shape index: {}]
  %s2 = inlined_call_operand.vmem [shape: f32[3,8,16], index: 2, kind: input, shape index: {}]
  %s3 = inlined_call_operand.vmem [shape: f32[8,3], index: 3, kind: input, shape index: {}]
  %s4 = inlined_call_operand.hbm [shape: f32[2,8,8,8], index: 4, kind: output, shape index: {}]
  %s5 = sld [smem:[#allocation0]]
  $region53: #{tpu_custom_call.1} parent=0
    _
  %s7 = ssub.s32 1, %s5
  %s8 = scalar_select 0, %s7, %s5
  $region1: #{tpu_custom_call.1} parent=0
    #allocation2 [shape = 'u8[4096]{0}', space=smem, size = 0x1000, scoped, tag = 'input window, operand 3, single buffered']
    #allocation3 [shape = 's32[2]{0}', space=sflag, size = 0x8, scoped, tag = 'scoped memory for tpu_custom_call.1']
    #allocation4 [shape = 's32[2]{0}', space=sflag, size = 0x8, scoped, tag = 'scoped memory for tpu_custom_call.1']
    #allocation5 [shape = 'u8[65536]{0}', space=vmem, size = 0x10000, scoped, tag = 'output window, operand 0']
    %9 = vsyncpa [#allocation4], 0
    %10 = vsyncpa [#allocation3], 0
    %s11 = scalar_lea.sflag [#allocation3], 1
    %12 = vsyncpa %s11, 0
    loop: start=0, step=1, limit=4
    $region2: #{tpu_custom_call.1} parent=1 // loop_pre_header
      _
    $region3: #{tpu_custom_call.1} parent=1 // loop_header
      %s14 = sphi 0, %s18
      %p15 = scmp.ge.s32.totalorder %s14, 4
      %s21 = sphi 0, %s33
      %s22 = sphi 0, %s29
      %s23 = sphi 0, %s21
      %s24 = sphi 0, %s22
      %s25 = sphi 0, %s23
      %s26 = sphi 0, %s24
      %s36 = sphi 0, %s38
      %s39 = sphi 0, %s36
      %s40 = sphi 0, %s39
      %s56 = sphi 0, %s40
      %s62 = sphi 0, %s64
      %s65 = sphi 0, %s62
      %s66 = sphi 0, %s65
      %s82 = sphi 0, %s66
      %s86 = sphi 0, %s86
      %s88 = sphi 0, %s86
      %s89 = sphi 0, %s88
      %s103 = sphi 0, %s89
      %s107 = sphi 0, %s107
      %s109 = sphi 0, %s107
      %s110 = sphi 0, %s109
      %s124 = sphi 0, %s110
      %s132 = sphi 0, %s134
      %s135 = sphi 0, %s132
      %s136 = sphi 0, %s135
      %s152 = sphi 0, %s136
    $region4: #{tpu_custom_call.1} parent=1 // loop_header_branch
      %17 = sbr.rel (%p15) target = $region8
    $region5: #{tpu_custom_call.1} parent=1 // loop_body
      %s19 = ssub.s32 %s14, 1
      %s20 = ssub.s32 %s14, 2
      %s27 = sadd.s32 1, %s22
      %p28 = scmp.ge.s32.totalorder %s27, 1
      %s29 = scalar_select %p28, 0, %s27
      %s30 = sadd.s32 1, %s21
      %s31 = scalar_select %p28, %s30, %s21
      %p32 = scmp.ge.s32.totalorder %s31, 2
      %s33 = scalar_select %p32, 0, %s31
      %s34 = ssub.s32 %s21, %s33
      %p35 = scmp.eq.s32.totalorder %s34, 0
      %s37 = sadd.s32 %s36, 1
      %s38 = scalar_select %p35, %s36, %s37
      %p41 = pneg %p35
      %p42 = scmp.eq.s32.totalorder %s14, 1
      %p43 = por %p41, %p42
      %p44 = scmp.ne.s32.totalorder %s36, %s39
      %p45 = scmp.eq.s32.totalorder %s14, 0
      %p46 = por %p44, %p45
      %p47 = scmp.ne.s32.totalorder %s36, %s39
      %p48 = scmp.eq.s32.totalorder %s19, 1
      %p49 = por %p47, %p48
      %p50 = scmp.ne.s32.totalorder %s39, %s40
      %p51 = scmp.eq.s32.totalorder %s19, 0
      %p52 = por %p50, %p51
      %p53 = scmp.ne.s32.totalorder %s39, %s40
      %p54 = scmp.eq.s32.totalorder %s20, 1
      %p55 = por %p53, %p54
      %p57 = scmp.ne.s32.totalorder %s40, %s56
      %p58 = scmp.eq.s32.totalorder %s20, 0
      %p59 = por %p57, %p58
      %s60 = ssub.s32 %s22, %s29
      %p61 = scmp.eq.s32.totalorder %s60, 0
      %s63 = sadd.s32 %s62, 1
      %s64 = scalar_select %p61, %s62, %s63
      %p67 = pneg %p61
      %p68 = scmp.eq.s32.totalorder %s14, 1
      %p69 = por %p67, %p68
      %p70 = scmp.ne.s32.totalorder %s62, %s65
      %p71 = scmp.eq.s32.totalorder %s14, 0
      %p72 = por %p70, %p71
      %p73 = scmp.ne.s32.totalorder %s62, %s65
      %p74 = scmp.eq.s32.totalorder %s19, 1
      %p75 = por %p73, %p74
      %p76 = scmp.ne.s32.totalorder %s65, %s66
      %p77 = scmp.eq.s32.totalorder %s19, 0
      %p78 = por %p76, %p77
      %p79 = scmp.ne.s32.totalorder %s65, %s66
      %p80 = scmp.eq.s32.totalorder %s20, 1
      %p81 = por %p79, %p80
      %p83 = scmp.ne.s32.totalorder %s66, %s82
      %p84 = scmp.eq.s32.totalorder %s20, 0
      %p85 = por %p83, %p84
      %s87 = sadd.s32 %s86, 1
      %p90 = scmp.eq.s32.totalorder %s14, 1
      %p91 = scmp.ne.s32.totalorder %s86, %s88
      %p92 = scmp.eq.s32.totalorder %s14, 0
      %p93 = por %p91, %p92
      %p94 = scmp.ne.s32.totalorder %s86, %s88
      %p95 = scmp.eq.s32.totalorder %s19, 1
      %p96 = por %p94, %p95
      %p97 = scmp.ne.s32.totalorder %s88, %s89
      %p98 = scmp.eq.s32.totalorder %s19, 0
      %p99 = por %p97, %p98
      %p100 = scmp.ne.s32.totalorder %s88, %s89
      %p101 = scmp.eq.s32.totalorder %s20, 1
      %p102 = por %p100, %p101
      %p104 = scmp.ne.s32.totalorder %s89, %s103
      %p105 = scmp.eq.s32.totalorder %s20, 0
      %p106 = por %p104, %p105
      %s108 = sadd.s32 %s107, 1
      %p111 = scmp.eq.s32.totalorder %s14, 1
      %p112 = scmp.ne.s32.totalorder %s107, %s109
      %p113 = scmp.eq.s32.totalorder %s14, 0
      %p114 = por %p112, %p113
      %p115 = scmp.ne.s32.totalorder %s107, %s109
      %p116 = scmp.eq.s32.totalorder %s19, 1
      %p117 = por %p115, %p116
      %p118 = scmp.ne.s32.totalorder %s109, %s110
      %p119 = scmp.eq.s32.totalorder %s19, 0
      %p120 = por %p118, %p119
      %p121 = scmp.ne.s32.totalorder %s109, %s110
      %p122 = scmp.eq.s32.totalorder %s20, 1
      %p123 = por %p121, %p122
      %p125 = scmp.ne.s32.totalorder %s110, %s124
      %p126 = scmp.eq.s32.totalorder %s20, 0
      %p127 = por %p125, %p126
      %s128 = ssub.s32 %s21, %s33
      %s129 = ssub.s32 %s22, %s29
      %s130 = sor.u32 %s128, %s129
      %p131 = scmp.eq.s32.totalorder %s130, 0
      %s133 = sadd.s32 %s132, 1
      %s134 = scalar_select %p131, %s132, %s133
      %p137 = pneg %p131
      %p138 = scmp.eq.s32.totalorder %s14, 1
      %p139 = por %p137, %p138
      %p140 = scmp.ne.s32.totalorder %s132, %s135
      %p141 = scmp.eq.s32.totalorder %s14, 0
      %p142 = por %p140, %p141
      %p143 = scmp.ne.s32.totalorder %s132, %s135
      %p144 = scmp.eq.s32.totalorder %s19, 1
      %p145 = por %p143, %p144
      %p146 = scmp.ne.s32.totalorder %s135, %s136
      %p147 = scmp.eq.s32.totalorder %s19, 0
      %p148 = por %p146, %p147
      %p149 = scmp.ne.s32.totalorder %s135, %s136
      %p150 = scmp.eq.s32.totalorder %s20, 1
      %p151 = por %p149, %p150
      %p153 = scmp.ne.s32.totalorder %s136, %s152
      %p154 = scmp.eq.s32.totalorder %s20, 0
      %p155 = por %p153, %p154
      %p156 = scmp.le.s32.totalorder 1, %s14
      %p157 = scmp.lt.s32.totalorder %s14, 3
      %p158 = pnand %p156, %p157
      %p159 = pneg %p158
      // Predicated region
      $region9: #{tpu_custom_call.1} parent=5 // pred_check
        _
      $region10: #{tpu_custom_call.1} parent=5 // pred_check_branch
        %161 = sbr.rel (%p158) target = $region12
      $region11: #{tpu_custom_call.1} parent=5 // pred_region
        %s162 = ssub.s32 %s14, 1
        // Predicated region
        $region13: #{tpu_custom_call.1} parent=11 // pred_check
          %p163 = pneg %p78
        $region14: #{tpu_custom_call.1} parent=11 // pred_check_branch
          %165 = sbr.rel (%p163) target = $region16
        $region15: #{tpu_custom_call.1} parent=11 // pred_region
          %p166 = scmp.lt.s32.totalorder %s24, 0
          %s167 = scalar_select %p166, %s24, 0
          %s168 = smul.addr %s167, 8
          %s169 = scalar_lea.vmem %s1, %s168
        $region16: #{tpu_custom_call.1} parent=11 // pred_fallthru
          _
        // Predicated region
        $region17: #{tpu_custom_call.1} parent=11 // pred_check
          %p170 = pneg %p99
        $region18: #{tpu_custom_call.1} parent=11 // pred_check_branch
          %172 = sbr.rel (%p170) target = $region20
        $region19: #{tpu_custom_call.1} parent=11 // pred_region
          _
        $region20: #{tpu_custom_call.1} parent=11 // pred_fallthru
          _
        // Predicated region
        $region21: #{tpu_custom_call.1} parent=11 // pred_check
          %p173 = pneg %p120
        $region22: #{tpu_custom_call.1} parent=11 // pred_check_branch
          %175 = sbr.rel (%p173) target = $region24
        $region23: #{tpu_custom_call.1} parent=11 // pred_region
          %177 = vsyncadd [#allocation4], 0
          %s179 = sshll.u32 %s3, 4
          %s180 = int_to_ptr.vmem [resolvable:$true] %s179
          %182 = dma.vmem_to_smem %s180, 128, [#allocation2], [#allocation4]
        $region24: #{tpu_custom_call.1} parent=11 // pred_fallthru
          _
      $region12: #{tpu_custom_call.1} parent=5 // pred_fallthru
        _
      %p183 = scmp.lt.s32.totalorder %s14, 2
      // Predicated region
      $region25: #{tpu_custom_call.1} parent=5 // pred_check
        %p184 = pneg %p183
      $region26: #{tpu_custom_call.1} parent=5 // pred_check_branch
        %186 = sbr.rel (%p184) target = $region28
      $region27: #{tpu_custom_call.1} parent=5 // pred_region
        // Predicated region
        $region29: #{tpu_custom_call.1} parent=27 // pred_check
          %p187 = pneg %p46
        $region30: #{tpu_custom_call.1} parent=27 // pred_check_branch
          %189 = sbr.rel (%p187) target = $region32
        $region31: #{tpu_custom_call.1} parent=27 // pred_region
          %p190 = scmp.lt.s32.totalorder %s21, 1
          %s191 = scalar_select %p190, %s21, 1
          %s192 = smul.addr %s191, 6
          %s193 = smul.addr %s192, 8
          %s194 = scalar_lea.vmem %s0, %s193
        $region32: #{tpu_custom_call.1} parent=27 // pred_fallthru
          _
      $region28: #{tpu_custom_call.1} parent=5 // pred_fallthru
        _
      %p195 = scmp.le.s32.totalorder 1, %s14
      %p196 = scmp.lt.s32.totalorder %s14, 3
      %p197 = pnand %p195, %p196
      %p198 = pneg %p197
      // Predicated region
      $region33: #{tpu_custom_call.1} parent=5 // pred_check
        _
      $region34: #{tpu_custom_call.1} parent=5 // pred_check_branch
        %200 = sbr.rel (%p197) target = $region36
      $region35: #{tpu_custom_call.1} parent=5 // pred_region
        %s201 = ssub.s32 %s14, 1
        // Predicated region
        $region37: #{tpu_custom_call.1} parent=35 // pred_check
          %p202 = pneg %p120
        $region38: #{tpu_custom_call.1} parent=35 // pred_check_branch
          %204 = sbr.rel (%p202) target = $region40
        $region39: #{tpu_custom_call.1} parent=35 // pred_region
          %206 = dma.done [#allocation4], 128
        $region40: #{tpu_custom_call.1} parent=35 // pred_fallthru
          _
        %207 = sfence
        %p208 = scmp.lt.s32.totalorder %s23, 1
        %s209 = scalar_select %p208, %s23, 1
        %s210 = smul.addr %s209, 6
        %s211 = smul.addr %s210, 8
        %s212 = scalar_lea.vmem %s0, %s211
        %p213 = pneg %p52
        %p214 = pneg %p49
        %p215 = scmp.lt.s32.totalorder %s24, 0
        %s216 = scalar_select %p215, %s24, 0
        %s217 = smul.addr %s216, 8
        %s218 = scalar_lea.vmem %s1, %s217
        %p219 = pneg %p78
        %p220 = pneg %p75
        %p221 = pneg %p99
        %p222 = pneg %p96
        %p223 = pneg %p120
        %p224 = pneg %p117
        %p225 = pneg %p148
        %p226 = pneg %p145
        %s227 = sand.u32 %s135, 1
        %s228 = scalar_lea.sflag [#allocation3], %s227
        %s229 = sand.u32 %s135, 1
        %s230 = smul.addr %s229, 64
        %s231 = scalar_lea.vmem [#allocation5], %s230
        %p232 = scmp.lt.s32.totalorder %s23, 1
        %s233 = scalar_select %p232, %s23, 1
        %s234 = smul.addr %s233, 6
        %s235 = smul.addr %s234, 8
        %s236 = scalar_lea.vmem %s0, %s235
        %p237 = scmp.lt.s32.totalorder %s24, 0
        %s238 = scalar_select %p237, %s24, 0
        %s239 = smul.addr %s238, 8
        %s240 = scalar_lea.vmem %s1, %s239
        %v241 = vld [vmem:[%s236] sm:$0xff]
        %v242 = vld [vmem:[%s236 + $0x8] sm:$0xff]
        %v243 = vld [vmem:[%s236 + $0x10] sm:$0xff]
        %v244 = vld [vmem:[%s236 + $0x18] sm:$0xff]
        %v245 = vld [vmem:[%s236 + $0x20] sm:$0xff]
        %v246 = vld [vmem:[%s236 + $0x28] sm:$0xff]
        %v247 = vld [vmem:[%s240] sm:$0xff]
        %v248 = vld [vmem:[%s240 + $0x8] sm:$0xff]
        %vm249 = vcmask 130048
        %v251 = vsel %vm249, %v241, 0
        %v254 = vsel %vm249, %v242, 0
        %v257 = vsel %vm249, %v243, 0
        %v260 = vsel %vm249, %v244, 0
        %v263 = vsel %vm249, %v245, 0
        %v266 = vsel %vm249, %v246, 0
        %268 = vmatpush.msra.mxu0 0.0
        %269 = vmatpush.msra.mxu0 0.0
        %270 = vmatpush.msra.mxu0 0.0
        %271 = vmatpush.msra.mxu0 0.0
        %272 = vmatpush.msra.mxu0 0.0
        %273 = vmatpush.msra.mxu0 0.0
        %274 = vmatpush.msra.mxu0 0.0
        %275 = vmatpush.msra.mxu0 0.0
        %276 = vmatpush.msra.mxu0 0.0
        %277 = vmatpush.msra.mxu0 0.0
        %278 = vmatpush.msra.mxu0 0.0
        %279 = vmatpush.msra.mxu0 0.0
        %280 = vmatpush.msra.mxu0 0.0
        %281 = vmatpush.msra.mxu0 0.0
        %282 = vmatpush.msra.mxu0 %v248
        %283 = vmatpush.msra.mxu0 %v247
        %284 = vmatmul.f32.gmra.mxu0 %v251
        %v285 = vpop.f32.mrf.mxu0
        %v286 = vadd.f32 0.0, %v285
        %287 = vmatmul.f32.gmra.mxu0 %v254
        %v288 = vpop.f32.mrf.mxu0
        %v289 = vadd.f32 0.0, %v288
        %290 = vmatmul.f32.gmra.mxu0 %v257
        %v291 = vpop.f32.mrf.mxu0
        %v292 = vadd.f32 0.0, %v291
        %293 = vmatmul.f32.gmra.mxu0 %v260
        %v294 = vpop.f32.mrf.mxu0
        %v295 = vadd.f32 0.0, %v294
        %296 = vmatmul.f32.gmra.mxu0 %v263
        %v297 = vpop.f32.mrf.mxu0
        %v298 = vadd.f32 0.0, %v297
        %299 = vmatmul.f32.gmra.mxu0 %v266
        %v300 = vpop.f32.mrf.mxu0
        %v301 = vadd.f32 0.0, %v300
        %302 = vdwg.mxu0
        %v303 = vld [vmem:[%s2] sm:$0xff]
        %v304 = vld [vmem:[%s2 + $0x8] sm:$0xff]
        %v305 = vld [vmem:[%s2 + $0x10] sm:$0xff]
        %v307 = vsel %vm249, %v303, 0
        %309 = vmatpush.msra.mxu0 0.0
        %310 = vmatpush.msra.mxu0 0.0
        %311 = vmatpush.msra.mxu0 0.0
        %312 = vmatpush.msra.mxu0 0.0
        %313 = vmatpush.msra.mxu0 0.0
        %314 = vmatpush.msra.mxu0 0.0
        %315 = vmatpush.msra.mxu0 0.0
        %316 = vmatpush.msra.mxu0 0.0
        %317 = vmatpush.msra.mxu0 0.0
        %318 = vmatpush.msra.mxu0 0.0
        %319 = vmatpush.msra.mxu0 0.0
        %320 = vmatpush.msra.mxu0 0.0
        %321 = vmatpush.msra.mxu0 0.0
        %322 = vmatpush.msra.mxu0 0.0
        %323 = vmatpush.msra.mxu0 %v289
        %324 = vmatpush.msra.mxu0 %v286
        %325 = vmatmul.f32.gmra.mxu0 %v307
        %v326 = vpop.f32.mrf.mxu0
        %v327 = vadd.f32 0.0, %v326
        %328 = vdwg.mxu0
        %v330 = vsel %vm249, %v304, 0
        %332 = vmatpush.msra.mxu0 0.0
        %333 = vmatpush.msra.mxu0 0.0
        %334 = vmatpush.msra.mxu0 0.0
        %335 = vmatpush.msra.mxu0 0.0
        %336 = vmatpush.msra.mxu0 0.0
        %337 = vmatpush.msra.mxu0 0.0
        %338 = vmatpush.msra.mxu0 0.0
        %339 = vmatpush.msra.mxu0 0.0
        %340 = vmatpush.msra.mxu0 0.0
        %341 = vmatpush.msra.mxu0 0.0
        %342 = vmatpush.msra.mxu0 0.0
        %343 = vmatpush.msra.mxu0 0.0
        %344 = vmatpush.msra.mxu0 0.0
        %345 = vmatpush.msra.mxu0 0.0
        %346 = vmatpush.msra.mxu0 %v295
        %347 = vmatpush.msra.mxu0 %v292
        %348 = vmatmul.f32.gmra.mxu0 %v330
        %v349 = vpop.f32.mrf.mxu0
        %v350 = vadd.f32 0.0, %v349
        %351 = vdwg.mxu0
        %v353 = vsel %vm249, %v305, 0
        %355 = vmatpush.msra.mxu0 0.0
        %356 = vmatpush.msra.mxu0 0.0
        %357 = vmatpush.msra.mxu0 0.0
        %358 = vmatpush.msra.mxu0 0.0
        %359 = vmatpush.msra.mxu0 0.0
        %360 = vmatpush.msra.mxu0 0.0
        %361 = vmatpush.msra.mxu0 0.0
        %362 = vmatpush.msra.mxu0 0.0
        %363 = vmatpush.msra.mxu0 0.0
        %364 = vmatpush.msra.mxu0 0.0
        %365 = vmatpush.msra.mxu0 0.0
        %366 = vmatpush.msra.mxu0 0.0
        %367 = vmatpush.msra.mxu0 0.0
        %368 = vmatpush.msra.mxu0 0.0
        %369 = vmatpush.msra.mxu0 %v301
        %370 = vmatpush.msra.mxu0 %v298
        %371 = vmatmul.f32.gmra.mxu0 %v353
        %v372 = vpop.f32.mrf.mxu0
        %v373 = vadd.f32 0.0, %v372
        %374 = vdwg.mxu0
        %s375 = sld [smem:[#allocation2]]
        %v376 = vstv %s375
        %v377 = vmul.f32 %v376, %v327
        %s378 = sld [smem:[#allocation2 + $0x1]]
        %v379 = vstv %s378
        %v380 = vmul.f32 %v379, %v350
        %v381 = vadd.f32 %v377, %v380
        %s382 = sld [smem:[#allocation2 + $0x2]]
        %v383 = vstv %s382
        %v384 = vmul.f32 %v383, %v373
        %v385 = vadd.f32 %v381, %v384
        %vm386 = vcmask 64512
        %387 = vst.msk [vmem:[%s231] sm:$0xff] %vm386, %v385
        %s388 = sld [smem:[#allocation2 + $0x80]]
        %v389 = vstv %s388
        %v390 = vmul.f32 %v389, %v327
        %s391 = sld [smem:[#allocation2 + $0x81]]
        %v392 = vstv %s391
        %v393 = vmul.f32 %v392, %v350
        %v394 = vadd.f32 %v390, %v393
        %s395 = sld [smem:[#allocation2 + $0x82]]
        %v396 = vstv %s395
        %v397 = vmul.f32 %v396, %v373
        %v398 = vadd.f32 %v394, %v397
        %s399 = scalar_lea.vmem %s231, 8 [#allocation5]
        %400 = vst.msk [vmem:[%s399] sm:$0xff] %vm386, %v398
        %s401 = sld [smem:[#allocation2 + $0x100]]
        %v402 = vstv %s401
        %v403 = vmul.f32 %v402, %v327
        %s404 = sld [smem:[#allocation2 + $0x101]]
        %v405 = vstv %s404
        %v406 = vmul.f32 %v405, %v350
        %v407 = vadd.f32 %v403, %v406
        %s408 = sld [smem:[#allocation2 + $0x102]]
        %v409 = vstv %s408
        %v410 = vmul.f32 %v409, %v373
        %v411 = vadd.f32 %v407, %v410
        %s412 = scalar_lea.vmem %s231, 16 [#allocation5]
        %413 = vst.msk [vmem:[%s412] sm:$0xff] %vm386, %v411
        %s414 = sld [smem:[#allocation2 + $0x180]]
        %v415 = vstv %s414
        %v416 = vmul.f32 %v415, %v327
        %s417 = sld [smem:[#allocation2 + $0x181]]
        %v418 = vstv %s417
        %v419 = vmul.f32 %v418, %v350
        %v420 = vadd.f32 %v416, %v419
        %s421 = sld [smem:[#allocation2 + $0x182]]
        %v422 = vstv %s421
        %v423 = vmul.f32 %v422, %v373
        %v424 = vadd.f32 %v420, %v423
        %s425 = scalar_lea.vmem %s231, 24 [#allocation5]
        %426 = vst.msk [vmem:[%s425] sm:$0xff] %vm386, %v424
        %s427 = sld [smem:[#allocation2 + $0x200]]
        %v428 = vstv %s427
        %v429 = vmul.f32 %v428, %v327
        %s430 = sld [smem:[#allocation2 + $0x201]]
        %v431 = vstv %s430
        %v432 = vmul.f32 %v431, %v350
        %v433 = vadd.f32 %v429, %v432
        %s434 = sld [smem:[#allocation2 + $0x202]]
        %v435 = vstv %s434
        %v436 = vmul.f32 %v435, %v373
        %v437 = vadd.f32 %v433, %v436
        %s438 = scalar_lea.vmem %s231, 32 [#allocation5]
        %439 = vst.msk [vmem:[%s438] sm:$0xff] %vm386, %v437
        %s440 = sld [smem:[#allocation2 + $0x280]]
        %v441 = vstv %s440
        %v442 = vmul.f32 %v441, %v327
        %s443 = sld [smem:[#allocation2 + $0x281]]
        %v444 = vstv %s443
        %v445 = vmul.f32 %v444, %v350
        %v446 = vadd.f32 %v442, %v445
        %s447 = sld [smem:[#allocation2 + $0x282]]
        %v448 = vstv %s447
        %v449 = vmul.f32 %v448, %v373
        %v450 = vadd.f32 %v446, %v449
        %s451 = scalar_lea.vmem %s231, 40 [#allocation5]
        %452 = vst.msk [vmem:[%s451] sm:$0xff] %vm386, %v450
        %s453 = sld [smem:[#allocation2 + $0x300]]
        %v454 = vstv %s453
        %v455 = vmul.f32 %v454, %v327
        %s456 = sld [smem:[#allocation2 + $0x301]]
        %v457 = vstv %s456
        %v458 = vmul.f32 %v457, %v350
        %v459 = vadd.f32 %v455, %v458
        %s460 = sld [smem:[#allocation2 + $0x302]]
        %v461 = vstv %s460
        %v462 = vmul.f32 %v461, %v373
        %v463 = vadd.f32 %v459, %v462
        %s464 = scalar_lea.vmem %s231, 48 [#allocation5]
        %465 = vst.msk [vmem:[%s464] sm:$0xff] %vm386, %v463
        %s466 = sld [smem:[#allocation2 + $0x380]]
        %v467 = vstv %s466
        %v468 = vmul.f32 %v467, %v327
        %s469 = sld [smem:[#allocation2 + $0x381]]
        %v470 = vstv %s469
        %v471 = vmul.f32 %v470, %v350
        %v472 = vadd.f32 %v468, %v471
        %s473 = sld [smem:[#allocation2 + $0x382]]
        %v474 = vstv %s473
        %v475 = vmul.f32 %v474, %v373
        %v476 = vadd.f32 %v472, %v475
        %s477 = scalar_lea.vmem %s231, 56 [#allocation5]
        %478 = vst.msk [vmem:[%s477] sm:$0xff] %vm386, %v476
        %s479 = sand.u32 %s135, 1
        %s480 = scalar_lea.sflag [#allocation3], %s479
        %s481 = sand.u32 %s135, 1
        %s482 = smul.addr %s481, 64
        %s483 = scalar_lea.vmem [#allocation5], %s482
        // Predicated region
        $region41: #{tpu_custom_call.1} parent=35 // pred_check
          %p484 = pneg %p145
        $region42: #{tpu_custom_call.1} parent=35 // pred_check_branch
          %486 = sbr.rel (%p484) target = $region44
        $region43: #{tpu_custom_call.1} parent=35 // pred_region
          %488 = vsyncadd %s480, 0
          %s489 = smul.addr %s23, 8
          %s490 = sadd.s32 %s24, %s489
          %s491 = smul.addr %s490, 8
          %s492 = scalar_lea.hbm %s4, %s491
          %s493 = sshll.u32 %s483, 4
          %s494 = int_to_ptr.vmem [resolvable:$true] %s493
          %s495 = sshll.u32 %s492, 4
          %s496 = int_to_ptr.hbm [resolvable:$true] %s495
          %501 = dma.vmem_to_hbm [thread:$0]  %s494, 1024, %s496, %s480, 128, 128, 8
        $region44: #{tpu_custom_call.1} parent=35 // pred_fallthru
          _
      $region36: #{tpu_custom_call.1} parent=5 // pred_fallthru
        _
      %p502 = scmp.le.s32.totalorder 2, %s14
      // Predicated region
      $region45: #{tpu_custom_call.1} parent=5 // pred_check
        %p503 = pneg %p502
      $region46: #{tpu_custom_call.1} parent=5 // pred_check_branch
        %505 = sbr.rel (%p503) target = $region48
      $region47: #{tpu_custom_call.1} parent=5 // pred_region
        %s506 = ssub.s32 %s14, 2
        // Predicated region
        $region49: #{tpu_custom_call.1} parent=47 // pred_check
          %p507 = pneg %p151
        $region50: #{tpu_custom_call.1} parent=47 // pred_check_branch
          %509 = sbr.rel (%p507) target = $region52
        $region51: #{tpu_custom_call.1} parent=47 // pred_region
          %s510 = sand.u32 %s136, 1
          %s511 = scalar_lea.sflag [#allocation3], %s510
          %s512 = sand.u32 %s136, 1
          %s513 = smul.addr %s512, 64
          %s514 = scalar_lea.vmem [#allocation5], %s513
          %516 = dma.done %s511, 1024
        $region52: #{tpu_custom_call.1} parent=47 // pred_fallthru
          _
      $region48: #{tpu_custom_call.1} parent=5 // pred_fallthru
        _
    $region6: #{tpu_custom_call.1} parent=1 // loop_footer
      %s18 = sadd.s32 1, %s14
    $region7: #{tpu_custom_call.1} parent=1 // loop_footer_branch
      %13 = sbr.rel target = $region3
    $region8: #{tpu_custom_call.1} parent=1 // loop_exit
      _
    %517 = vsyncpa [#allocation3], 1
    %s518 = scalar_lea.sflag [#allocation3], 1
    %519 = vsyncpa %s518, 1
    %520 = vsyncpa [#allocation4], 1
    %s521 = scalar_lea.sflag [#allocation4], 1
    %522 = vsyncpa %s521, 1

// kernel: tpu_custom_call.1
$region0: #{tpu_custom_call.1}
  #allocation0 [shape = 'u32[]', space=smem, size = 0x4, offset = 0x4, fixed_abs, tag = 'smem constant byte address 0x4 - core index']
  #allocation1 [shape = 'u32[72,128]{1,0:T(1,128)}', space=vmem, size = 0x9000, scoped, tag = 'internal scratch']
  %s0 = inlined_call_operand.vmem [shape: f32[2,48,16], index: 0, kind: input, shape index: {}]
  %s1 = inlined_call_operand.vmem [shape: f32[16,8], index: 1, kind: input, shape index: {}]
  %s2 = inlined_call_operand.vmem [shape: f32[3,8,16], index: 2, kind: input, shape index: {}]
  %s3 = inlined_call_operand.vmem [shape: f32[8,3], index: 3, kind: input, shape index: {}]
  %s4 = inlined_call_operand.hbm [shape: f32[2,8,8,8], index: 4, kind: output, shape index: {}]
  %s5 = sld [smem:[#allocation0]]
  $region53: #{tpu_custom_call.1} parent=0
    _
  %s7 = ssub.s32 1, %s5
  %s8 = scalar_select 0, %s7, %s5
  $region1: #{tpu_custom_call.1} parent=0
    #allocation2 [shape = 'u8[4096]{0}', space=smem, size = 0x1000, scoped, tag = 'input window, operand 3, single buffered']
    #allocation3 [shape = 's32[2]{0}', space=sflag, size = 0x8, scoped, tag = 'scoped memory for tpu_custom_call.1']
    #allocation4 [shape = 's32[2]{0}', space=sflag, size = 0x8, scoped, tag = 'scoped memory for tpu_custom_call.1']
    #allocation5 [shape = 'u8[65536]{0}', space=vmem, size = 0x10000, scoped, tag = 'output window, operand 0']
    %9 = vsyncpa [#allocation4], 0
    %10 = vsyncpa [#allocation3], 0
    %s11 = scalar_lea.sflag [#allocation3], 1
    %12 = vsyncpa %s11, 0
    loop: start=0, step=1, limit=4
    $region2: #{tpu_custom_call.1} parent=1 // loop_pre_header
      _
    $region3: #{tpu_custom_call.1} parent=1 // loop_header
      %s14 = sphi 0, %s18
      %p15 = scmp.ge.s32.totalorder %s14, 4
      %s21 = sphi 0, %s33
      %s22 = sphi 0, %s29
      %s23 = sphi 0, %s21
      %s24 = sphi 0, %s22
      %s25 = sphi 0, %s23
      %s26 = sphi 0, %s24
      %s36 = sphi 0, %s38
      %s39 = sphi 0, %s36
      %s40 = sphi 0, %s39
      %s56 = sphi 0, %s40
      %s62 = sphi 0, %s64
      %s65 = sphi 0, %s62
      %s66 = sphi 0, %s65
      %s82 = sphi 0, %s66
      %s86 = sphi 0, %s86
      %s88 = sphi 0, %s86
      %s89 = sphi 0, %s88
      %s103 = sphi 0, %s89
      %s107 = sphi 0, %s107
      %s109 = sphi 0, %s107
      %s110 = sphi 0, %s109
      %s124 = sphi 0, %s110
      %s132 = sphi 0, %s134
      %s135 = sphi 0, %s132
      %s136 = sphi 0, %s135
      %s152 = sphi 0, %s136
    $region4: #{tpu_custom_call.1} parent=1 // loop_header_branch
      %17 = sbr.rel (%p15) target = $region8
    $region5: #{tpu_custom_call.1} parent=1 // loop_body
      %s19 = ssub.s32 %s14, 1
      %s20 = ssub.s32 %s14, 2
      %s27 = sadd.s32 1, %s22
      %p28 = scmp.ge.s32.totalorder %s27, 1
      %s29 = scalar_select %p28, 0, %s27
      %s30 = sadd.s32 1, %s21
      %s31 = scalar_select %p28, %s30, %s21
      %p32 = scmp.ge.s32.totalorder %s31, 2
      %s33 = scalar_select %p32, 0, %s31
      %s34 = ssub.s32 %s21, %s33
      %p35 = scmp.eq.s32.totalorder %s34, 0
      %s37 = sadd.s32 %s36, 1
      %s38 = scalar_select %p35, %s36, %s37
      %p41 = pneg %p35
      %p42 = scmp.eq.s32.totalorder %s14, 1
      %p43 = por %p41, %p42
      %p44 = scmp.ne.s32.totalorder %s36, %s39
      %p45 = scmp.eq.s32.totalorder %s14, 0
      %p46 = por %p44, %p45
      %p47 = scmp.ne.s32.totalorder %s36, %s39
      %p48 = scmp.eq.s32.totalorder %s19, 1
      %p49 = por %p47, %p48
      %p50 = scmp.ne.s32.totalorder %s39, %s40
      %p51 = scmp.eq.s32.totalorder %s19, 0
      %p52 = por %p50, %p51
      %p53 = scmp.ne.s32.totalorder %s39, %s40
      %p54 = scmp.eq.s32.totalorder %s20, 1
      %p55 = por %p53, %p54
      %p57 = scmp.ne.s32.totalorder %s40, %s56
      %p58 = scmp.eq.s32.totalorder %s20, 0
      %p59 = por %p57, %p58
      %s60 = ssub.s32 %s22, %s29
      %p61 = scmp.eq.s32.totalorder %s60, 0
      %s63 = sadd.s32 %s62, 1
      %s64 = scalar_select %p61, %s62, %s63
      %p67 = pneg %p61
      %p68 = scmp.eq.s32.totalorder %s14, 1
      %p69 = por %p67, %p68
      %p70 = scmp.ne.s32.totalorder %s62, %s65
      %p71 = scmp.eq.s32.totalorder %s14, 0
      %p72 = por %p70, %p71
      %p73 = scmp.ne.s32.totalorder %s62, %s65
      %p74 = scmp.eq.s32.totalorder %s19, 1
      %p75 = por %p73, %p74
      %p76 = scmp.ne.s32.totalorder %s65, %s66
      %p77 = scmp.eq.s32.totalorder %s19, 0
      %p78 = por %p76, %p77
      %p79 = scmp.ne.s32.totalorder %s65, %s66
      %p80 = scmp.eq.s32.totalorder %s20, 1
      %p81 = por %p79, %p80
      %p83 = scmp.ne.s32.totalorder %s66, %s82
      %p84 = scmp.eq.s32.totalorder %s20, 0
      %p85 = por %p83, %p84
      %s87 = sadd.s32 %s86, 1
      %p90 = scmp.eq.s32.totalorder %s14, 1
      %p91 = scmp.ne.s32.totalorder %s86, %s88
      %p92 = scmp.eq.s32.totalorder %s14, 0
      %p93 = por %p91, %p92
      %p94 = scmp.ne.s32.totalorder %s86, %s88
      %p95 = scmp.eq.s32.totalorder %s19, 1
      %p96 = por %p94, %p95
      %p97 = scmp.ne.s32.totalorder %s88, %s89
      %p98 = scmp.eq.s32.totalorder %s19, 0
      %p99 = por %p97, %p98
      %p100 = scmp.ne.s32.totalorder %s88, %s89
      %p101 = scmp.eq.s32.totalorder %s20, 1
      %p102 = por %p100, %p101
      %p104 = scmp.ne.s32.totalorder %s89, %s103
      %p105 = scmp.eq.s32.totalorder %s20, 0
      %p106 = por %p104, %p105
      %s108 = sadd.s32 %s107, 1
      %p111 = scmp.eq.s32.totalorder %s14, 1
      %p112 = scmp.ne.s32.totalorder %s107, %s109
      %p113 = scmp.eq.s32.totalorder %s14, 0
      %p114 = por %p112, %p113
      %p115 = scmp.ne.s32.totalorder %s107, %s109
      %p116 = scmp.eq.s32.totalorder %s19, 1
      %p117 = por %p115, %p116
      %p118 = scmp.ne.s32.totalorder %s109, %s110
      %p119 = scmp.eq.s32.totalorder %s19, 0
      %p120 = por %p118, %p119
      %p121 = scmp.ne.s32.totalorder %s109, %s110
      %p122 = scmp.eq.s32.totalorder %s20, 1
      %p123 = por %p121, %p122
      %p125 = scmp.ne.s32.totalorder %s110, %s124
      %p126 = scmp.eq.s32.totalorder %s20, 0
      %p127 = por %p125, %p126
      %s128 = ssub.s32 %s21, %s33
      %s129 = ssub.s32 %s22, %s29
      %s130 = sor.u32 %s128, %s129
      %p131 = scmp.eq.s32.totalorder %s130, 0
      %s133 = sadd.s32 %s132, 1
      %s134 = scalar_select %p131, %s132, %s133
      %p137 = pneg %p131
      %p138 = scmp.eq.s32.totalorder %s14, 1
      %p139 = por %p137, %p138
      %p140 = scmp.ne.s32.totalorder %s132, %s135
      %p141 = scmp.eq.s32.totalorder %s14, 0
      %p142 = por %p140, %p141
      %p143 = scmp.ne.s32.totalorder %s132, %s135
      %p144 = scmp.eq.s32.totalorder %s19, 1
      %p145 = por %p143, %p144
      %p146 = scmp.ne.s32.totalorder %s135, %s136
      %p147 = scmp.eq.s32.totalorder %s19, 0
      %p148 = por %p146, %p147
      %p149 = scmp.ne.s32.totalorder %s135, %s136
      %p150 = scmp.eq.s32.totalorder %s20, 1
      %p151 = por %p149, %p150
      %p153 = scmp.ne.s32.totalorder %s136, %s152
      %p154 = scmp.eq.s32.totalorder %s20, 0
      %p155 = por %p153, %p154
      %p156 = scmp.le.s32.totalorder 1, %s14
      %p157 = scmp.lt.s32.totalorder %s14, 3
      %p158 = pnand %p156, %p157
      %p159 = pneg %p158
      // Predicated region
      $region9: #{tpu_custom_call.1} parent=5 // pred_check
        _
      $region10: #{tpu_custom_call.1} parent=5 // pred_check_branch
        %161 = sbr.rel (%p158) target = $region12
      $region11: #{tpu_custom_call.1} parent=5 // pred_region
        %s162 = ssub.s32 %s14, 1
        // Predicated region
        $region13: #{tpu_custom_call.1} parent=11 // pred_check
          %p163 = pneg %p78
        $region14: #{tpu_custom_call.1} parent=11 // pred_check_branch
          %165 = sbr.rel (%p163) target = $region16
        $region15: #{tpu_custom_call.1} parent=11 // pred_region
          %p166 = scmp.lt.s32.totalorder %s24, 0
          %s167 = scalar_select %p166, %s24, 0
          %s168 = smul.addr %s167, 8
          %s169 = scalar_lea.vmem %s1, %s168
        $region16: #{tpu_custom_call.1} parent=11 // pred_fallthru
          _
        // Predicated region
        $region17: #{tpu_custom_call.1} parent=11 // pred_check
          %p170 = pneg %p99
        $region18: #{tpu_custom_call.1} parent=11 // pred_check_branch
          %172 = sbr.rel (%p170) target = $region20
        $region19: #{tpu_custom_call.1} parent=11 // pred_region
          _
        $region20: #{tpu_custom_call.1} parent=11 // pred_fallthru
          _
        // Predicated region
        $region21: #{tpu_custom_call.1} parent=11 // pred_check
          %p173 = pneg %p120
        $region22: #{tpu_custom_call.1} parent=11 // pred_check_branch
          %175 = sbr.rel (%p173) target = $region24
        $region23: #{tpu_custom_call.1} parent=11 // pred_region
          %177 = vsyncadd [#allocation4], 0
          %s179 = sshll.u32 %s3, 4
          %s180 = int_to_ptr.vmem [resolvable:$true] %s179
          %182 = dma.vmem_to_smem %s180, 128, [#allocation2], [#allocation4]
        $region24: #{tpu_custom_call.1} parent=11 // pred_fallthru
          _
      $region12: #{tpu_custom_call.1} parent=5 // pred_fallthru
        _
      %p183 = scmp.lt.s32.totalorder %s14, 2
      // Predicated region
      $region25: #{tpu_custom_call.1} parent=5 // pred_check
        %p184 = pneg %p183
      $region26: #{tpu_custom_call.1} parent=5 // pred_check_branch
        %186 = sbr.rel (%p184) target = $region28
      $region27: #{tpu_custom_call.1} parent=5 // pred_region
        // Predicated region
        $region29: #{tpu_custom_call.1} parent=27 // pred_check
          %p187 = pneg %p46
        $region30: #{tpu_custom_call.1} parent=27 // pred_check_branch
          %189 = sbr.rel (%p187) target = $region32
        $region31: #{tpu_custom_call.1} parent=27 // pred_region
          %p190 = scmp.lt.s32.totalorder %s21, 1
          %s191 = scalar_select %p190, %s21, 1
          %s192 = smul.addr %s191, 6
          %s193 = smul.addr %s192, 8
          %s194 = scalar_lea.vmem %s0, %s193
        $region32: #{tpu_custom_call.1} parent=27 // pred_fallthru
          _
      $region28: #{tpu_custom_call.1} parent=5 // pred_fallthru
        _
      %p195 = scmp.le.s32.totalorder 1, %s14
      %p196 = scmp.lt.s32.totalorder %s14, 3
      %p197 = pnand %p195, %p196
      %p198 = pneg %p197
      // Predicated region
      $region33: #{tpu_custom_call.1} parent=5 // pred_check
        _
      $region34: #{tpu_custom_call.1} parent=5 // pred_check_branch
        %200 = sbr.rel (%p197) target = $region36
      $region35: #{tpu_custom_call.1} parent=5 // pred_region
        %s201 = ssub.s32 %s14, 1
        // Predicated region
        $region37: #{tpu_custom_call.1} parent=35 // pred_check
          %p202 = pneg %p120
        $region38: #{tpu_custom_call.1} parent=35 // pred_check_branch
          %204 = sbr.rel (%p202) target = $region40
        $region39: #{tpu_custom_call.1} parent=35 // pred_region
          %206 = dma.done [#allocation4], 128
        $region40: #{tpu_custom_call.1} parent=35 // pred_fallthru
          _
        %207 = sfence
        %p208 = scmp.lt.s32.totalorder %s23, 1
        %s209 = scalar_select %p208, %s23, 1
        %s210 = smul.addr %s209, 6
        %s211 = smul.addr %s210, 8
        %s212 = scalar_lea.vmem %s0, %s211
        %p213 = pneg %p52
        %p214 = pneg %p49
        %p215 = scmp.lt.s32.totalorder %s24, 0
        %s216 = scalar_select %p215, %s24, 0
        %s217 = smul.addr %s216, 8
        %s218 = scalar_lea.vmem %s1, %s217
        %p219 = pneg %p78
        %p220 = pneg %p75
        %p221 = pneg %p99
        %p222 = pneg %p96
        %p223 = pneg %p120
        %p224 = pneg %p117
        %p225 = pneg %p148
        %p226 = pneg %p145
        %s227 = sand.u32 %s135, 1
        %s228 = scalar_lea.sflag [#allocation3], %s227
        %s229 = sand.u32 %s135, 1
        %s230 = smul.addr %s229, 64
        %s231 = scalar_lea.vmem [#allocation5], %s230
        %p232 = scmp.lt.s32.totalorder %s23, 1
        %s233 = scalar_select %p232, %s23, 1
        %s234 = smul.addr %s233, 6
        %s235 = smul.addr %s234, 8
        %s236 = scalar_lea.vmem %s0, %s235
        %p237 = scmp.lt.s32.totalorder %s24, 0
        %s238 = scalar_select %p237, %s24, 0
        %s239 = smul.addr %s238, 8
        %s240 = scalar_lea.vmem %s1, %s239
        %v241 = vld [vmem:[%s236] sm:$0xff]
        %v242 = vld [vmem:[%s236 + $0x8] sm:$0xff]
        %v243 = vld [vmem:[%s236 + $0x10] sm:$0xff]
        %v244 = vld [vmem:[%s236 + $0x18] sm:$0xff]
        %v245 = vld [vmem:[%s236 + $0x20] sm:$0xff]
        %v246 = vld [vmem:[%s236 + $0x28] sm:$0xff]
        %v247 = vld [vmem:[%s240] sm:$0xff]
        %v248 = vld [vmem:[%s240 + $0x8] sm:$0xff]
        %vm249 = vcmask 130048
        %v251 = vsel %vm249, %v241, 0
        %v254 = vsel %vm249, %v242, 0
        %v257 = vsel %vm249, %v243, 0
        %v260 = vsel %vm249, %v244, 0
        %v263 = vsel %vm249, %v245, 0
        %v266 = vsel %vm249, %v246, 0
        %268 = vmatpush.msra.mxu0 0.0
        %269 = vmatpush.msra.mxu0 0.0
        %270 = vmatpush.msra.mxu0 0.0
        %271 = vmatpush.msra.mxu0 0.0
        %272 = vmatpush.msra.mxu0 0.0
        %273 = vmatpush.msra.mxu0 0.0
        %274 = vmatpush.msra.mxu0 0.0
        %275 = vmatpush.msra.mxu0 0.0
        %276 = vmatpush.msra.mxu0 0.0
        %277 = vmatpush.msra.mxu0 0.0
        %278 = vmatpush.msra.mxu0 0.0
        %279 = vmatpush.msra.mxu0 0.0
        %280 = vmatpush.msra.mxu0 0.0
        %281 = vmatpush.msra.mxu0 0.0
        %282 = vmatpush.msra.mxu0 %v248
        %283 = vmatpush.msra.mxu0 %v247
        %284 = vmatmul.f32.gmra.mxu0 %v251
        %v285 = vpop.f32.mrf.mxu0
        %v286 = vadd.f32 0.0, %v285
        %287 = vmatmul.f32.gmra.mxu0 %v254
        %v288 = vpop.f32.mrf.mxu0
        %v289 = vadd.f32 0.0, %v288
        %290 = vmatmul.f32.gmra.mxu0 %v257
        %v291 = vpop.f32.mrf.mxu0
        %v292 = vadd.f32 0.0, %v291
        %293 = vmatmul.f32.gmra.mxu0 %v260
        %v294 = vpop.f32.mrf.mxu0
        %v295 = vadd.f32 0.0, %v294
        %296 = vmatmul.f32.gmra.mxu0 %v263
        %v297 = vpop.f32.mrf.mxu0
        %v298 = vadd.f32 0.0, %v297
        %299 = vmatmul.f32.gmra.mxu0 %v266
        %v300 = vpop.f32.mrf.mxu0
        %v301 = vadd.f32 0.0, %v300
        %302 = vdwg.mxu0
        %v303 = vld [vmem:[%s2] sm:$0xff]
        %v304 = vld [vmem:[%s2 + $0x8] sm:$0xff]
        %v305 = vld [vmem:[%s2 + $0x10] sm:$0xff]
        %v307 = vsel %vm249, %v303, 0
        %309 = vmatpush.msra.mxu0 0.0
        %310 = vmatpush.msra.mxu0 0.0
        %311 = vmatpush.msra.mxu0 0.0
        %312 = vmatpush.msra.mxu0 0.0
        %313 = vmatpush.msra.mxu0 0.0
        %314 = vmatpush.msra.mxu0 0.0
        %315 = vmatpush.msra.mxu0 0.0
        %316 = vmatpush.msra.mxu0 0.0
        %317 = vmatpush.msra.mxu0 0.0
        %318 = vmatpush.msra.mxu0 0.0
        %319 = vmatpush.msra.mxu0 0.0
        %320 = vmatpush.msra.mxu0 0.0
        %321 = vmatpush.msra.mxu0 0.0
        %322 = vmatpush.msra.mxu0 0.0
        %323 = vmatpush.msra.mxu0 %v289
        %324 = vmatpush.msra.mxu0 %v286
        %325 = vmatmul.f32.gmra.mxu0 %v307
        %v326 = vpop.f32.mrf.mxu0
        %v327 = vadd.f32 0.0, %v326
        %328 = vdwg.mxu0
        %v330 = vsel %vm249, %v304, 0
        %332 = vmatpush.msra.mxu0 0.0
        %333 = vmatpush.msra.mxu0 0.0
        %334 = vmatpush.msra.mxu0 0.0
        %335 = vmatpush.msra.mxu0 0.0
        %336 = vmatpush.msra.mxu0 0.0
        %337 = vmatpush.msra.mxu0 0.0
        %338 = vmatpush.msra.mxu0 0.0
        %339 = vmatpush.msra.mxu0 0.0
        %340 = vmatpush.msra.mxu0 0.0
        %341 = vmatpush.msra.mxu0 0.0
        %342 = vmatpush.msra.mxu0 0.0
        %343 = vmatpush.msra.mxu0 0.0
        %344 = vmatpush.msra.mxu0 0.0
        %345 = vmatpush.msra.mxu0 0.0
        %346 = vmatpush.msra.mxu0 %v295
        %347 = vmatpush.msra.mxu0 %v292
        %348 = vmatmul.f32.gmra.mxu0 %v330
        %v349 = vpop.f32.mrf.mxu0
        %v350 = vadd.f32 0.0, %v349
        %351 = vdwg.mxu0
        %v353 = vsel %vm249, %v305, 0
        %355 = vmatpush.msra.mxu0 0.0
        %356 = vmatpush.msra.mxu0 0.0
        %357 = vmatpush.msra.mxu0 0.0
        %358 = vmatpush.msra.mxu0 0.0
        %359 = vmatpush.msra.mxu0 0.0
        %360 = vmatpush.msra.mxu0 0.0
        %361 = vmatpush.msra.mxu0 0.0
        %362 = vmatpush.msra.mxu0 0.0
        %363 = vmatpush.msra.mxu0 0.0
        %364 = vmatpush.msra.mxu0 0.0
        %365 = vmatpush.msra.mxu0 0.0
        %366 = vmatpush.msra.mxu0 0.0
        %367 = vmatpush.msra.mxu0 0.0
        %368 = vmatpush.msra.mxu0 0.0
        %369 = vmatpush.msra.mxu0 %v301
        %370 = vmatpush.msra.mxu0 %v298
        %371 = vmatmul.f32.gmra.mxu0 %v353
        %v372 = vpop.f32.mrf.mxu0
        %v373 = vadd.f32 0.0, %v372
        %374 = vdwg.mxu0
        %s375 = sld [smem:[#allocation2]]
        %v376 = vstv %s375
        %v377 = vmul.f32 %v376, %v327
        %s378 = sld [smem:[#allocation2 + $0x1]]
        %v379 = vstv %s378
        %v380 = vmul.f32 %v379, %v350
        %v381 = vadd.f32 %v377, %v380
        %s382 = sld [smem:[#allocation2 + $0x2]]
        %v383 = vstv %s382
        %v384 = vmul.f32 %v383, %v373
        %v385 = vadd.f32 %v381, %v384
        %vm386 = vcmask 64512
        %387 = vst.msk [vmem:[%s231] sm:$0xff] %vm386, %v385
        %s388 = sld [smem:[#allocation2 + $0x80]]
        %v389 = vstv %s388
        %v390 = vmul.f32 %v389, %v327
        %s391 = sld [smem:[#allocation2 + $0x81]]
        %v392 = vstv %s391
        %v393 = vmul.f32 %v392, %v350
        %v394 = vadd.f32 %v390, %v393
        %s395 = sld [smem:[#allocation2 + $0x82]]
        %v396 = vstv %s395
        %v397 = vmul.f32 %v396, %v373
        %v398 = vadd.f32 %v394, %v397
        %s399 = scalar_lea.vmem %s231, 8 [#allocation5]
        %400 = vst.msk [vmem:[%s399] sm:$0xff] %vm386, %v398
        %s401 = sld [smem:[#allocation2 + $0x100]]
        %v402 = vstv %s401
        %v403 = vmul.f32 %v402, %v327
        %s404 = sld [smem:[#allocation2 + $0x101]]
        %v405 = vstv %s404
        %v406 = vmul.f32 %v405, %v350
        %v407 = vadd.f32 %v403, %v406
        %s408 = sld [smem:[#allocation2 + $0x102]]
        %v409 = vstv %s408
        %v410 = vmul.f32 %v409, %v373
        %v411 = vadd.f32 %v407, %v410
        %s412 = scalar_lea.vmem %s231, 16 [#allocation5]
        %413 = vst.msk [vmem:[%s412] sm:$0xff] %vm386, %v411
        %s414 = sld [smem:[#allocation2 + $0x180]]
        %v415 = vstv %s414
        %v416 = vmul.f32 %v415, %v327
        %s417 = sld [smem:[#allocation2 + $0x181]]
        %v418 = vstv %s417
        %v419 = vmul.f32 %v418, %v350
        %v420 = vadd.f32 %v416, %v419
        %s421 = sld [smem:[#allocation2 + $0x182]]
        %v422 = vstv %s421
        %v423 = vmul.f32 %v422, %v373
        %v424 = vadd.f32 %v420, %v423
        %s425 = scalar_lea.vmem %s231, 24 [#allocation5]
        %426 = vst.msk [vmem:[%s425] sm:$0xff] %vm386, %v424
        %s427 = sld [smem:[#allocation2 + $0x200]]
        %v428 = vstv %s427
        %v429 = vmul.f32 %v428, %v327
        %s430 = sld [smem:[#allocation2 + $0x201]]
        %v431 = vstv %s430
        %v432 = vmul.f32 %v431, %v350
        %v433 = vadd.f32 %v429, %v432
        %s434 = sld [smem:[#allocation2 + $0x202]]
        %v435 = vstv %s434
        %v436 = vmul.f32 %v435, %v373
        %v437 = vadd.f32 %v433, %v436
        %s438 = scalar_lea.vmem %s231, 32 [#allocation5]
        %439 = vst.msk [vmem:[%s438] sm:$0xff] %vm386, %v437
        %s440 = sld [smem:[#allocation2 + $0x280]]
        %v441 = vstv %s440
        %v442 = vmul.f32 %v441, %v327
        %s443 = sld [smem:[#allocation2 + $0x281]]
        %v444 = vstv %s443
        %v445 = vmul.f32 %v444, %v350
        %v446 = vadd.f32 %v442, %v445
        %s447 = sld [smem:[#allocation2 + $0x282]]
        %v448 = vstv %s447
        %v449 = vmul.f32 %v448, %v373
        %v450 = vadd.f32 %v446, %v449
        %s451 = scalar_lea.vmem %s231, 40 [#allocation5]
        %452 = vst.msk [vmem:[%s451] sm:$0xff] %vm386, %v450
        %s453 = sld [smem:[#allocation2 + $0x300]]
        %v454 = vstv %s453
        %v455 = vmul.f32 %v454, %v327
        %s456 = sld [smem:[#allocation2 + $0x301]]
        %v457 = vstv %s456
        %v458 = vmul.f32 %v457, %v350
        %v459 = vadd.f32 %v455, %v458
        %s460 = sld [smem:[#allocation2 + $0x302]]
        %v461 = vstv %s460
        %v462 = vmul.f32 %v461, %v373
        %v463 = vadd.f32 %v459, %v462
        %s464 = scalar_lea.vmem %s231, 48 [#allocation5]
        %465 = vst.msk [vmem:[%s464] sm:$0xff] %vm386, %v463
        %s466 = sld [smem:[#allocation2 + $0x380]]
        %v467 = vstv %s466
        %v468 = vmul.f32 %v467, %v327
        %s469 = sld [smem:[#allocation2 + $0x381]]
        %v470 = vstv %s469
        %v471 = vmul.f32 %v470, %v350
        %v472 = vadd.f32 %v468, %v471
        %s473 = sld [smem:[#allocation2 + $0x382]]
        %v474 = vstv %s473
        %v475 = vmul.f32 %v474, %v373
        %v476 = vadd.f32 %v472, %v475
        %s477 = scalar_lea.vmem %s231, 56 [#allocation5]
        %478 = vst.msk [vmem:[%s477] sm:$0xff] %vm386, %v476
        %s479 = sand.u32 %s135, 1
        %s480 = scalar_lea.sflag [#allocation3], %s479
        %s481 = sand.u32 %s135, 1
        %s482 = smul.addr %s481, 64
        %s483 = scalar_lea.vmem [#allocation5], %s482
        // Predicated region
        $region41: #{tpu_custom_call.1} parent=35 // pred_check
          %p484 = pneg %p145
        $region42: #{tpu_custom_call.1} parent=35 // pred_check_branch
          %486 = sbr.rel (%p484) target = $region44
        $region43: #{tpu_custom_call.1} parent=35 // pred_region
          %488 = vsyncadd %s480, 0
          %s489 = smul.addr %s23, 8
          %s490 = sadd.s32 %s24, %s489
          %s491 = smul.addr %s490, 8
          %s492 = scalar_lea.hbm %s4, %s491
          %s493 = sshll.u32 %s483, 4
          %s494 = int_to_ptr.vmem [resolvable:$true] %s493
          %s495 = sshll.u32 %s492, 4
          %s496 = int_to_ptr.hbm [resolvable:$true] %s495
          %501 = dma.vmem_to_hbm [thread:$0]  %s494, 1024, %s496, %s480, 128, 128, 8
        $region44: #{tpu_custom_call.1} parent=35 // pred_fallthru
          _
      $region36: #{tpu_custom_call.1} parent=5 // pred_fallthru
        _
      %p502 = scmp.le.s32.totalorder 2, %s14
      // Predicated region
      $region45: #{tpu_custom_call.1} parent=5 // pred_check
        %p503 = pneg %p502
      $region46: #{tpu_custom_call.1} parent=5 // pred_check_branch
        %505 = sbr.rel (%p503) target = $region48
      $region47: #{tpu_custom_call.1} parent=5 // pred_region
        %s506 = ssub.s32 %s14, 2
        // Predicated region
        $region49: #{tpu_custom_call.1} parent=47 // pred_check
          %p507 = pneg %p151
        $region50: #{tpu_custom_call.1} parent=47 // pred_check_branch
          %509 = sbr.rel (%p507) target = $region52
        $region51: #{tpu_custom_call.1} parent=47 // pred_region
          %s510 = sand.u32 %s136, 1
          %s511 = scalar_lea.sflag [#allocation3], %s510
          %s512 = sand.u32 %s136, 1
          %s513 = smul.addr %s512, 64
          %s514 = scalar_lea.vmem [#allocation5], %s513
          %516 = dma.done %s511, 1024
        $region52: #{tpu_custom_call.1} parent=47 // pred_fallthru
          _
      $region48: #{tpu_custom_call.1} parent=5 // pred_fallthru
        _
    $region6: #{tpu_custom_call.1} parent=1 // loop_footer
      %s18 = sadd.s32 1, %s14
    $region7: #{tpu_custom_call.1} parent=1 // loop_footer_branch
      %13 = sbr.rel target = $region3
    $region8: #{tpu_custom_call.1} parent=1 // loop_exit
      _
    %517 = vsyncpa [#allocation3], 1
    %s518 = scalar_lea.sflag [#allocation3], 1
    %519 = vsyncpa %s518, 1
    %520 = vsyncpa [#allocation4], 1
    %s521 = scalar_lea.sflag [#allocation4], 1
    %522 = vsyncpa %s521, 1

</llo_original>
